<compile_context>
chip_gen: v7x
topology: tpu7x:2x2x1
jax: 0.10.0
libtpu: 0.0.40
codegen_flags: <defaults>
</compile_context>

<pallas_src>
import functools
import math

import jax
import jax.numpy as jnp
from jax.experimental import pallas as pl
from jax.experimental.pallas import tpu as pltpu


TILE_T = 256            # token-tile size for the two-pass performer kernels
LINEAR_TILE_M = 512     # M-tile for the final projection
VMEM_LIMIT = 32 * 1024 * 1024


def _round_up(n, mult=128):
    return ((n + mult - 1) // mult) * mult


def _pad_to(a, rows, cols):
    return jnp.pad(a, ((0, rows - a.shape[0]), (0, cols - a.shape[1])))


# ----------------------------------------------------------------------------
# Glue: nn.Unfold (im2col) semantics, plain JAX (data movement only).
# ----------------------------------------------------------------------------
def _unfold_nchw(x, k, stride, pad):
    """PyTorch nn.Unfold: (B, C, H, W) -> (B, C*k*k, L), channel-major patches."""
    B, C, H, W = x.shape
    xp = jnp.pad(x, ((0, 0), (0, 0), (pad, pad), (pad, pad)))
    Hp, Wp = H + 2 * pad, W + 2 * pad
    oh = (Hp - k) // stride + 1
    ow = (Wp - k) // stride + 1
    cols = []
    for i in range(k):
        for j in range(k):
            patch = xp[:, :, i:i + stride * oh:stride, j:j + stride * ow:stride]
            cols.append(patch.reshape(B, C, oh * ow))
    col = jnp.stack(cols, axis=2)  # (B, C, k*k, L) matches torch (C, kH, kW) order
    return col.reshape(B, C * k * k, oh * ow)


# ----------------------------------------------------------------------------
# Pass A: per token-tile LayerNorm + kqv; accumulate kp_sum and kptv.
# ----------------------------------------------------------------------------
def _perf_stats_kernel(x_ref, vec_ref, kqv_w_ref, wt_ref,
                       kqv_ref, kpsum_ref, kptv_ref, *,
                       dim, m, d_pad, e_pad, m_pad, tile_t, t_real):
    t = pl.program_id(1)

    @pl.when(t == 0)
    def _():
        kpsum_ref[...] = jnp.zeros_like(kpsum_ref)
        kptv_ref[...] = jnp.zeros_like(kptv_ref)

    x = x_ref[0].astype(jnp.float32)                  # (tile_t, d_pad), pads = 0
    n1w = vec_ref[0:1, :d_pad]
    n1b = vec_ref[1:2, :d_pad]
    kqv_b = vec_ref[2:3, :3 * e_pad]

    # norm1: single-pass stats over the REAL dim (padded cols are zero)
    s1 = jnp.sum(x, axis=-1, keepdims=True)
    s2 = jnp.sum(x * x, axis=-1, keepdims=True)
    mu = s1 * (1.0 / dim)
    var = s2 * (1.0 / dim) - mu * mu
    xn = (x - mu) * jax.lax.rsqrt(var + 1e-5) * n1w + n1b     # padded cols -> 0

    # kqv = Linear(dim, 3*emb), lane-aligned (k | q | v) blocks of width e_pad
    kqv = jnp.dot(xn.astype(jnp.bfloat16), kqv_w_ref[...],
                  preferred_element_type=jnp.float32) + kqv_b  # (tile_t, 3*e_pad)
    kqv_ref[0] = kqv                                           # f32 for pass B

    k = kqv[:, 0:e_pad]
    v = kqv[:, 2 * e_pad:3 * e_pad]

    # mask tokens past the real sequence length (tile padding rows)
    row = t * tile_t + jax.lax.broadcasted_iota(jnp.int32, (tile_t, 1), 0)
    row_mask = (row < t_real).astype(jnp.float32)
    # padded random-feature columns must be exactly 0 AFTER the exp
    m_mask = (jax.lax.broadcasted_iota(jnp.int32, (1, m_pad), 1)
              < m).astype(jnp.float32)

    zd = 0.5 * jnp.sum(k * k, axis=-1, keepdims=True)
    wtz = jnp.dot(k.astype(jnp.bfloat16), wt_ref[...],
                  preferred_element_type=jnp.float32)
    kp = jnp.exp(wtz - zd) * ((1.0 / math.sqrt(m)) * m_mask) * row_mask

    # accumulate across token tiles (outputs stay VMEM-resident over t)
    kpsum_ref[0] += jnp.sum(kp, axis=0, keepdims=True)
    kptv_ref[0] += jax.lax.dot_general(                        # MXU, K = tile_t
        kp.astype(jnp.bfloat16), v.astype(jnp.bfloat16),
        dimension_numbers=(((0,), (0,)), ((), ())),
        preferred_element_type=jnp.float32)                    # (m_pad, e_pad)


# ----------------------------------------------------------------------------
# Pass B: per token-tile performer output + projection + residual + MLP.
# ----------------------------------------------------------------------------
def _perf_out_kernel(kqv_ref, kpsum_ref, kptv_ref, vec_ref, wt_ref,
                     proj_w_ref, mlp_w1_ref, mlp_w2_ref, o_ref, *,
                     emb, m, e_pad, m_pad):
    kqv = kqv_ref[0]                                  # (tile_t, 3*e_pad) f32
    q = kqv[:, e_pad:2 * e_pad]
    v = kqv[:, 2 * e_pad:3 * e_pad]

    proj_b = vec_ref[0:1, :e_pad]
    n2w = vec_ref[1:2, :e_pad]
    n2b = vec_ref[2:3, :e_pad]
    mlp_b1 = vec_ref[3:4, :e_pad]
    mlp_b2 = vec_ref[4:5, :e_pad]

    m_mask = (jax.lax.broadcasted_iota(jnp.int32, (1, m_pad), 1)
              < m).astype(jnp.float32)
    zd = 0.5 * jnp.sum(q * q, axis=-1, keepdims=True)
    wtz = jnp.dot(q.astype(jnp.bfloat16), wt_ref[...],
                  preferred_element_type=jnp.float32)
    qp = jnp.exp(wtz - zd) * ((1.0 / math.sqrt(m)) * m_mask)   # (tile_t, m_pad)

    kp_sum = kpsum_ref[0][0:1, :]                              # (1, m_pad)
    denom = jnp.sum(qp * kp_sum, axis=-1, keepdims=True)       # (tile_t, 1)

    y = jnp.dot(qp.astype(jnp.bfloat16), kptv_ref[0].astype(jnp.bfloat16),
                preferred_element_type=jnp.float32)            # (tile_t, e_pad)
    y = y * pl.reciprocal(denom + 1e-8, approx=True)

    # skip connection uses v (dropout is identity at inference)
    proj = jnp.dot(y.astype(jnp.bfloat16), proj_w_ref[...],
                   preferred_element_type=jnp.float32) + proj_b
    y = v + proj                                               # padded cols stay 0

    # x + mlp(norm2(x))
    t1 = jnp.sum(y, axis=-1, keepdims=True)
    t2 = jnp.sum(y * y, axis=-1, keepdims=True)
    mu2 = t1 * (1.0 / emb)
    var2 = t2 * (1.0 / emb) - mu2 * mu2
    yn = (y - mu2) * jax.lax.rsqrt(var2 + 1e-5) * n2w + n2b

    h = jnp.dot(yn.astype(jnp.bfloat16), mlp_w1_ref[...],
                preferred_element_type=jnp.float32) + mlp_b1
    h = jax.nn.gelu(h, approximate=True)           # tanh GELU (EUP); GELU(0)=0
    h = jnp.dot(h.astype(jnp.bfloat16), mlp_w2_ref[...],
                preferred_element_type=jnp.float32) + mlp_b2

    o_ref[0] = (y + h).astype(o_ref.dtype)                     # bf16 out


def token_performer(x, pp, tile_t=TILE_T):
    """x: (B, T, dim) -> (B, T, emb) bf16 (unpadded)."""
    B, T, dim = x.shape
    d_pad, e_pad, m_pad = pp['d_pad'], pp['e_pad'], pp['m_pad']
    emb, m = pp['emb'], pp['m']

    tt = min(tile_t, _round_up(T, 8))
    t_pad = _round_up(T, tt)
    nt = t_pad // tt

    xp = jnp.pad(x, ((0, 0), (0, t_pad - T), (0, d_pad - dim)))

    stats_kernel = functools.partial(
        _perf_stats_kernel, dim=dim, m=m, d_pad=d_pad, e_pad=e_pad,
        m_pad=m_pad, tile_t=tt, t_real=T)

    kqv, kp_sum, kptv = pl.pallas_call(
        stats_kernel,
        grid=(B, nt),
        in_specs=[
            pl.BlockSpec((1, tt, d_pad), lambda b, t: (b, t, 0)),
            pl.BlockSpec(pp['vecs_a'].shape, lambda b, t: (0, 0)),
            pl.BlockSpec(pp['kqv_w'].shape, lambda b, t: (0, 0)),
            pl.BlockSpec(pp['wt'].shape, lambda b, t: (0, 0)),
        ],
        out_shape=(
            jax.ShapeDtypeStruct((B, t_pad, 3 * e_pad), jnp.float32),
            jax.ShapeDtypeStruct((B, 8, m_pad), jnp.float32),
            jax.ShapeDtypeStruct((B, m_pad, e_pad), jnp.float32),
        ),
        out_specs=(
            pl.BlockSpec((1, tt, 3 * e_pad), lambda b, t: (b, t, 0)),
            pl.BlockSpec((1, 8, m_pad), lambda b, t: (b, 0, 0)),
            pl.BlockSpec((1, m_pad, e_pad), lambda b, t: (b, 0, 0)),
        ),
        compiler_params=pltpu.CompilerParams(
            dimension_semantics=("parallel", "arbitrary"),
            vmem_limit_bytes=VMEM_LIMIT),
    )(xp, pp['vecs_a'], pp['kqv_w'], pp['wt'])

    out_kernel = functools.partial(
        _perf_out_kernel, emb=emb, m=m, e_pad=e_pad, m_pad=m_pad)

    out = pl.pallas_call(
        out_kernel,
        grid=(B, nt),
        in_specs=[
            pl.BlockSpec((1, tt, 3 * e_pad), lambda b, t: (b, t, 0)),
            pl.BlockSpec((1, 8, m_pad), lambda b, t: (b, 0, 0)),
            pl.BlockSpec((1, m_pad, e_pad), lambda b, t: (b, 0, 0)),
            pl.BlockSpec(pp['vecs_b'].shape, lambda b, t: (0, 0)),
            pl.BlockSpec(pp['wt'].shape, lambda b, t: (0, 0)),
            pl.BlockSpec(pp['proj_w'].shape, lambda b, t: (0, 0)),
            pl.BlockSpec(pp['mlp_w1'].shape, lambda b, t: (0, 0)),
            pl.BlockSpec(pp['mlp_w2'].shape, lambda b, t: (0, 0)),
        ],
        out_shape=jax.ShapeDtypeStruct((B, t_pad, e_pad), jnp.bfloat16),
        out_specs=pl.BlockSpec((1, tt, e_pad), lambda b, t: (b, t, 0)),
        compiler_params=pltpu.CompilerParams(
            dimension_semantics=("parallel", "parallel"),
            vmem_limit_bytes=VMEM_LIMIT),
    )(kqv, kp_sum, kptv, pp['vecs_b'], pp['wt'], pp['proj_w'],
      pp['mlp_w1'], pp['mlp_w2'])

    return out[:, :T, :emb]


# ----------------------------------------------------------------------------
# Final Linear projection (cdiv-tiled over M, lane-dense E).
# ----------------------------------------------------------------------------
def _linear_kernel(x_ref, w_ref, b_ref, o_ref):
    o_ref[...] = (jnp.dot(x_ref[...].astype(jnp.bfloat16), w_ref[...],
                          preferred_element_type=jnp.float32) + b_ref[...])


def linear_pallas(x2d, w_bf16, b2d, tile_m=LINEAR_TILE_M):
    M, Dp = x2d.shape
    Ep = w_bf16.shape[1]
    tm = min(tile_m, _round_up(M, 8))
    m_up = _round_up(M, tm)
    xp = jnp.pad(x2d, ((0, m_up - M), (0, 0)))
    out = pl.pallas_call(
        _linear_kernel,
        out_shape=jax.ShapeDtypeStruct((m_up, Ep), jnp.float32),
        grid=(m_up // tm,),
        in_specs=[pl.BlockSpec((tm, Dp), lambda i: (i, 0)),
                  pl.BlockSpec((Dp, Ep), lambda i: (0, 0)),
                  pl.BlockSpec((1, Ep), lambda i: (0, 0))],
        out_specs=pl.BlockSpec((tm, Ep), lambda i: (i, 0)),
        compiler_params=pltpu.CompilerParams(
            dimension_semantics=("parallel",),
            vmem_limit_bytes=VMEM_LIMIT),
    )(xp, w_bf16, b2d)
    return out[:M]


# ----------------------------------------------------------------------------
# Parameter construction (deterministic, synthetic) + lane-dense padding.
# ----------------------------------------------------------------------------
def _prepare_performer(raw, dim, emb, m):
    d_pad, e_pad, m_pad = _round_up(dim), _round_up(emb), _round_up(m)
    wa = max(d_pad, 3 * e_pad)

    # Split kqv into (k|q|v) blocks, pad each to e_pad so in-kernel slices
    # land on 128-aligned offsets.
    kqv_w = jnp.concatenate(
        [_pad_to(raw['kqv_w'][:, i * emb:(i + 1) * emb], d_pad, e_pad)
         for i in range(3)], axis=1)
    kqv_b = jnp.concatenate(
        [_pad_to(raw['kqv_b'][:, i * emb:(i + 1) * emb], 1, e_pad)
         for i in range(3)], axis=1)

    vecs_a = jnp.concatenate([_pad_to(raw['n1w'], 1, wa),
                              _pad_to(raw['n1b'], 1, wa),
                              _pad_to(kqv_b, 1, wa)], axis=0)
    vecs_a = jnp.pad(vecs_a, ((0, 8 - vecs_a.shape[0]), (0, 0)))     # (8, wa)

    vecs_b = jnp.concatenate(
        [_pad_to(v, 1, e_pad) for v in
         (raw['proj_b'], raw['n2w'], raw['n2b'], raw['mlp_b1'], raw['mlp_b2'])],
        axis=0)
    vecs_b = jnp.pad(vecs_b, ((0, 8 - vecs_b.shape[0]), (0, 0)))     # (8, e_pad)

    return dict(
        dim=dim, emb=emb, m=m, d_pad=d_pad, e_pad=e_pad, m_pad=m_pad,
        vecs_a=vecs_a, vecs_b=vecs_b,
        kqv_w=kqv_w.astype(jnp.bfloat16),
        wt=_pad_to(raw['w_t'], e_pad, m_pad).astype(jnp.bfloat16),
        proj_w=_pad_to(raw['proj_w'], e_pad, e_pad).astype(jnp.bfloat16),
        mlp_w1=_pad_to(raw['mlp_w1'], e_pad, e_pad).astype(jnp.bfloat16),
        mlp_w2=_pad_to(raw['mlp_w2'], e_pad, e_pad).astype(jnp.bfloat16),
    )


def init_performer_params(key, dim, emb, kernel_ratio=0.5):
    m = max(1, int(emb * kernel_ratio))
    ks = jax.random.split(key, 5)

    def nrm(k, shape, scale):
        return scale * jax.random.normal(k, shape, dtype=jnp.float32)

    raw = dict(
        n1w=jnp.ones((1, dim), jnp.float32),
        n1b=jnp.zeros((1, dim), jnp.float32),
        kqv_w=nrm(ks[0], (dim, 3 * emb), 1.0 / math.sqrt(dim)),
        kqv_b=jnp.zeros((1, 3 * emb), jnp.float32),
        # performer random features (w.T) ~ Gaussian * sqrt(m)
        w_t=nrm(ks[1], (emb, m), math.sqrt(m) / math.sqrt(emb)),
        proj_w=nrm(ks[2], (emb, emb), 1.0 / math.sqrt(emb)),
        proj_b=jnp.zeros((1, emb), jnp.float32),
        n2w=jnp.ones((1, emb), jnp.float32),
        n2b=jnp.zeros((1, emb), jnp.float32),
        mlp_w1=nrm(ks[3], (emb, emb), 1.0 / math.sqrt(emb)),
        mlp_b1=jnp.zeros((1, emb), jnp.float32),
        mlp_w2=nrm(ks[4], (emb, emb), 1.0 / math.sqrt(emb)),
        mlp_b2=jnp.zeros((1, emb), jnp.float32),
    )
    return _prepare_performer(raw, dim, emb, m)


def init_t2t_params(key, in_chans, token_dim, embed_dim):
    k1, k2, k3 = jax.random.split(key, 3)
    d2 = token_dim * 9
    d2_pad = _round_up(d2)
    e_pad = _round_up(embed_dim)
    proj_w = (jax.random.normal(k3, (d2, embed_dim), dtype=jnp.float32)
              / math.sqrt(d2))
    return dict(
        att1=init_performer_params(k1, in_chans * 49, token_dim),
        att2=init_performer_params(k2, d2, token_dim),
        proj_w=_pad_to(proj_w, d2_pad, e_pad).astype(jnp.bfloat16),
        proj_b=jnp.zeros((1, e_pad), jnp.float32),
        proj_d=d2, proj_d_pad=d2_pad, embed_dim=embed_dim, embed_pad=e_pad,
    )


# ----------------------------------------------------------------------------
# Full T2T_module forward (tokens_type='performer').
# ----------------------------------------------------------------------------
def t2t_module_forward(x, params, embed_dim):
    # soft_split0: Unfold(7, stride=4, pad=2) then transpose(1, 2)
    x = _unfold_nchw(x, 7, 4, 2)
    x = jnp.transpose(x, (0, 2, 1))              # (B, L0, C*49)
    x = token_performer(x, params['att1'])       # (B, L0, token_dim) bf16

    B, L0, C = x.shape
    s0 = int(math.sqrt(L0))
    x = jnp.transpose(x, (0, 2, 1)).reshape(B, C, s0, s0)

    # soft_split1: Unfold(3, stride=2, pad=1)
    x = _unfold_nchw(x, 3, 2, 1)
    x = jnp.transpose(x, (0, 2, 1))              # (B, L1, token_dim*9)
    x = token_performer(x, params['att2'])       # (B, L1, token_dim) bf16

    B, L1, C = x.shape
    s1 = int(math.sqrt(L1))
    x = jnp.transpose(x, (0, 2, 1)).reshape(B, C, s1, s1)

    # soft_split2: Unfold(3, stride=2, pad=1)
    x = _unfold_nchw(x, 3, 2, 1)
    x = jnp.transpose(x, (0, 2, 1))              # (B, L2, token_dim*9)

    B, L2, D = x.shape
    xp = jnp.pad(x.reshape(B * L2, D), ((0, 0), (0, params['proj_d_pad'] - D)))
    y = linear_pallas(xp, params['proj_w'], params['proj_b'])
    return y[:, :embed_dim].reshape(B, L2, embed_dim)


if __name__ == "__main__":
    # Small shapes consistent with the module: img_size=16, in_chans=3,
    # token_dim=16, embed_dim=32, batch=2.
    B, C, H, W = 2, 3, 16, 16
    token_dim, embed_dim = 16, 32

    root = jax.random.PRNGKey(0)
    kx, kparam = jax.random.split(root)
    x = jax.random.normal(kx, (B, C, H, W), dtype=jnp.float32)
    params = init_t2t_params(kparam, C, token_dim, embed_dim)

    out = t2t_module_forward(x, params, embed_dim)
    out = jax.block_until_ready(out)

    assert out.shape == (B, 1, embed_dim), out.shape
    assert bool(jnp.all(jnp.isfinite(out)))
    print("KERNEL_OK")
</pallas_src>

<mosaic_0001>
module attributes {stable_mosaic.version = 11 : i64} {
  func.func @_perf_stats_kernel(%arg0: i32, %arg1: i32, %arg2: memref<1x16x256xf32, #tpu.memory_space<vmem>>, %arg3: memref<8x384xf32, #tpu.memory_space<vmem>>, %arg4: memref<256x384xbf16, #tpu.memory_space<vmem>>, %arg5: memref<128x128xbf16, #tpu.memory_space<vmem>>, %arg6: memref<1x16x384xf32, #tpu.memory_space<vmem>>, %arg7: memref<1x8x128xf32, #tpu.memory_space<vmem>>, %arg8: memref<1x128x128xf32, #tpu.memory_space<vmem>>) attributes {dimension_semantics = [#tpu.dimension_semantics<parallel>, #tpu.dimension_semantics<arbitrary>], iteration_bounds = array<i64: 2, 1>, scalar_prefetch = 0 : i64, scratch_operands = 0 : i64, tpu.core_type = #tpu.core_type<tc>, window_params = [{transform_indices = @transform_0, window_bounds = array<i64: 1, 16, 256>}, {pipeline_mode = #tpu.pipeline_mode<synchronous>, transform_indices = @transform_1, window_bounds = array<i64: 8, 384>}, {pipeline_mode = #tpu.pipeline_mode<synchronous>, transform_indices = @transform_2, window_bounds = array<i64: 256, 384>}, {pipeline_mode = #tpu.pipeline_mode<synchronous>, transform_indices = @transform_3, window_bounds = array<i64: 128, 128>}, {transform_indices = @transform_4, window_bounds = array<i64: 1, 16, 384>}, {transform_indices = @transform_5, window_bounds = array<i64: 1, 8, 128>}, {transform_indices = @transform_6, window_bounds = array<i64: 1, 128, 128>}]} {
    %c0_i32 = arith.constant 0 : i32
    %0 = arith.cmpi eq, %arg1, %c0_i32 : i32
    %1 = arith.extui %0 : i1 to i32
    %c0_i32_0 = arith.constant 0 : i32
    %2 = arith.cmpi ne, %1, %c0_i32_0 : i32
    scf.if %2 {
      %cst_38 = arith.constant 0.000000e+00 : f32
      %88 = vector.broadcast %cst_38 : f32 to vector<1x8x128xf32>
      %c0_39 = arith.constant 0 : index
      %c0_40 = arith.constant 0 : index
      %c0_41 = arith.constant 0 : index
      %89 = vector.load %arg7[%c0_39, %c0_40, %c0_41] : memref<1x8x128xf32, #tpu.memory_space<vmem>>, vector<1x8x128xf32>
      tpu.vector_store %arg7[%c0_39, %c0_40, %c0_41], %88 {strides = array<i32>} : memref<1x8x128xf32, #tpu.memory_space<vmem>>, vector<1x8x128xf32>,
      %cst_42 = arith.constant 0.000000e+00 : f32
      %90 = vector.broadcast %cst_42 : f32 to vector<1x128x128xf32>
      %c0_43 = arith.constant 0 : index
      %c0_44 = arith.constant 0 : index
      %c0_45 = arith.constant 0 : index
      %91 = vector.load %arg8[%c0_43, %c0_44, %c0_45] : memref<1x128x128xf32, #tpu.memory_space<vmem>>, vector<1x128x128xf32>
      tpu.vector_store %arg8[%c0_43, %c0_44, %c0_45], %90 {strides = array<i32>} : memref<1x128x128xf32, #tpu.memory_space<vmem>>, vector<1x128x128xf32>,
    } else {
    }
    %c0 = arith.constant 0 : index
    %c0_1 = arith.constant 0 : index
    %c0_2 = arith.constant 0 : index
    %3 = vector.load %arg2[%c0, %c0_1, %c0_2] : memref<1x16x256xf32, #tpu.memory_space<vmem>>, vector<1x16x256xf32>
    %4 = vector.shape_cast %3 : vector<1x16x256xf32> to vector<16x256xf32>
    %c0_3 = arith.constant 0 : index
    %c0_4 = arith.constant 0 : index
    %5 = vector.load %arg3[%c0_3, %c0_4] : memref<8x384xf32, #tpu.memory_space<vmem>>, vector<1x256xf32>
    %c1 = arith.constant 1 : index
    %c0_5 = arith.constant 0 : index
    %6 = vector.load %arg3[%c1, %c0_5] : memref<8x384xf32, #tpu.memory_space<vmem>>, vector<1x256xf32>
    %c2 = arith.constant 2 : index
    %c0_6 = arith.constant 0 : index
    %7 = vector.load %arg3[%c2, %c0_6] : memref<8x384xf32, #tpu.memory_space<vmem>>, vector<1x384xf32>
    %cst = arith.constant dense<0.000000e+00> : vector<16xf32>
    %8 = vector.multi_reduction <add>, %4, %cst [1] : vector<16x256xf32> to vector<16xf32>
    %9 = vector.shape_cast %8 : vector<16xf32> to vector<16x1xf32>
    %10 = arith.mulf %4, %4 : vector<16x256xf32>
    %cst_7 = arith.constant dense<0.000000e+00> : vector<16xf32>
    %11 = vector.multi_reduction <add>, %10, %cst_7 [1] : vector<16x256xf32> to vector<16xf32>
    %12 = vector.shape_cast %11 : vector<16xf32> to vector<16x1xf32>
    %cst_8 = arith.constant 0.00680272094 : f32
    %13 = vector.broadcast %cst_8 : f32 to vector<16x1xf32>
    %14 = arith.mulf %9, %13 : vector<16x1xf32>
    %cst_9 = arith.constant 0.00680272094 : f32
    %15 = vector.broadcast %cst_9 : f32 to vector<16x1xf32>
    %16 = arith.mulf %12, %15 : vector<16x1xf32>
    %17 = arith.mulf %14, %14 : vector<16x1xf32>
    %18 = arith.subf %16, %17 : vector<16x1xf32>
    %19 = vector.broadcast %14 : vector<16x1xf32> to vector<16x256xf32>
    %20 = arith.subf %4, %19 : vector<16x256xf32>
    %cst_10 = arith.constant 9.99999974E-6 : f32
    %21 = vector.broadcast %cst_10 : f32 to vector<16x1xf32>
    %22 = arith.addf %18, %21 : vector<16x1xf32>
    %23 = math.rsqrt %22 : vector<16x1xf32>
    %24 = vector.broadcast %23 : vector<16x1xf32> to vector<16x256xf32>
    %25 = arith.mulf %20, %24 : vector<16x256xf32>
    %26 = vector.broadcast %5 : vector<1x256xf32> to vector<16x256xf32>
    %27 = arith.mulf %25, %26 : vector<16x256xf32>
    %28 = vector.broadcast %6 : vector<1x256xf32> to vector<16x256xf32>
    %29 = arith.addf %27, %28 : vector<16x256xf32>
    %30 = arith.truncf %29 : vector<16x256xf32> to vector<16x256xbf16>
    %c0_11 = arith.constant 0 : index
    %c0_12 = arith.constant 0 : index
    %31 = vector.load %arg4[%c0_11, %c0_12] : memref<256x384xbf16, #tpu.memory_space<vmem>>, vector<256x384xbf16>
    %cst_13 = arith.constant dense<0.000000e+00> : vector<16x384xf32>
    %32 = tpu.matmul %30, %31, %cst_13 {dimension_numbers = #tpu.dot_dimension_numbers<[1], [0], [0], [1], [0, 0, 1, 1], [], []>} : vector<16x256xbf16>, vector<256x384xbf16>, vector<16x384xf32> -> vector<16x384xf32>
    %33 = vector.broadcast %7 : vector<1x384xf32> to vector<16x384xf32>
    %34 = arith.addf %32, %33 : vector<16x384xf32>
    %c0_14 = arith.constant 0 : index
    %c0_15 = arith.constant 0 : index
    %c0_16 = arith.constant 0 : index
    %35 = vector.load %arg6[%c0_14, %c0_15, %c0_16] : memref<1x16x384xf32, #tpu.memory_space<vmem>>, vector<1x16x384xf32>
    %36 = vector.shape_cast %35 : vector<1x16x384xf32> to vector<16x384xf32>
    %37 = vector.shape_cast %34 : vector<16x384xf32> to vector<1x16x384xf32>
    tpu.vector_store %arg6[%c0_14, %c0_15, %c0_16], %37 {strides = array<i32>} : memref<1x16x384xf32, #tpu.memory_space<vmem>>, vector<1x16x384xf32>,
    %38 = vector.extract_strided_slice %34 {offsets = [0, 0], sizes = [16, 128], strides = [1, 1]} : vector<16x384xf32> to vector<16x128xf32>
    %39 = vector.extract_strided_slice %34 {offsets = [0, 256], sizes = [16, 128], strides = [1, 1]} : vector<16x384xf32> to vector<16x128xf32>
    %c16_i32 = arith.constant 16 : i32
    %40 = arith.muli %arg1, %c16_i32 : i32
    %41 = tpu.iota {dimensions = array<i32: 0>} : vector<16x1xi32>
    %42 = vector.broadcast %40 : i32 to vector<16x1xi32>
    %43 = arith.addi %42, %41 : vector<16x1xi32>
    %c16_i32_17 = arith.constant 16 : i32
    %44 = vector.broadcast %c16_i32_17 : i32 to vector<16x1xi32>
    %45 = arith.cmpi slt, %43, %44 : vector<16x1xi32>
    %46 = arith.extui %45 : vector<16x1xi1> to vector<16x1xi32>
    %47 = arith.sitofp %46 : vector<16x1xi32> to vector<16x1xf32>
    %48 = tpu.iota {dimensions = array<i32: 1>} : vector<1x128xi32>
    %c8_i32 = arith.constant 8 : i32
    %49 = vector.broadcast %c8_i32 : i32 to vector<1x128xi32>
    %50 = arith.cmpi slt, %48, %49 : vector<1x128xi32>
    %51 = arith.extui %50 : vector<1x128xi1> to vector<1x128xi32>
    %52 = arith.sitofp %51 : vector<1x128xi32> to vector<1x128xf32>
    %53 = arith.mulf %38, %38 : vector<16x128xf32>
    %cst_18 = arith.constant dense<0.000000e+00> : vector<16xf32>
    %54 = vector.multi_reduction <add>, %53, %cst_18 [1] : vector<16x128xf32> to vector<16xf32>
    %55 = vector.shape_cast %54 : vector<16xf32> to vector<16x1xf32>
    %cst_19 = arith.constant 5.000000e-01 : f32
    %56 = vector.broadcast %cst_19 : f32 to vector<16x1xf32>
    %57 = arith.mulf %56, %55 : vector<16x1xf32>
    %58 = arith.truncf %38 : vector<16x128xf32> to vector<16x128xbf16>
    %c0_20 = arith.constant 0 : index
    %c0_21 = arith.constant 0 : index
    %59 = vector.load %arg5[%c0_20, %c0_21] : memref<128x128xbf16, #tpu.memory_space<vmem>>, vector<128x128xbf16>
    %cst_22 = arith.constant dense<0.000000e+00> : vector<16x128xf32>
    %60 = tpu.matmul %58, %59, %cst_22 {dimension_numbers = #tpu.dot_dimension_numbers<[1], [0], [0], [1], [0, 0, 1, 1], [], []>} : vector<16x128xbf16>, vector<128x128xbf16>, vector<16x128xf32> -> vector<16x128xf32>
    %61 = vector.broadcast %57 : vector<16x1xf32> to vector<16x128xf32>
    %62 = arith.subf %60, %61 : vector<16x128xf32>
    %63 = math.exp %62 : vector<16x128xf32>
    %cst_23 = arith.constant 0.353553385 : f32
    %64 = vector.broadcast %cst_23 : f32 to vector<1x128xf32>
    %65 = arith.mulf %64, %52 : vector<1x128xf32>
    %66 = vector.broadcast %65 : vector<1x128xf32> to vector<16x128xf32>
    %67 = arith.mulf %63, %66 : vector<16x128xf32>
    %68 = vector.broadcast %47 : vector<16x1xf32> to vector<16x128xf32>
    %69 = arith.mulf %67, %68 : vector<16x128xf32>
    %c0_24 = arith.constant 0 : index
    %c0_25 = arith.constant 0 : index
    %c0_26 = arith.constant 0 : index
    %70 = vector.load %arg7[%c0_24, %c0_25, %c0_26] : memref<1x8x128xf32, #tpu.memory_space<vmem>>, vector<1x8x128xf32>
    %71 = vector.shape_cast %70 : vector<1x8x128xf32> to vector<8x128xf32>
    %cst_27 = arith.constant dense<0.000000e+00> : vector<128xf32>
    %72 = vector.multi_reduction <add>, %69, %cst_27 [0] : vector<16x128xf32> to vector<128xf32>
    %73 = vector.shape_cast %72 : vector<128xf32> to vector<1x128xf32>
    %74 = vector.broadcast %73 : vector<1x128xf32> to vector<8x128xf32>
    %75 = arith.addf %71, %74 : vector<8x128xf32>
    %c0_28 = arith.constant 0 : index
    %c0_29 = arith.constant 0 : index
    %c0_30 = arith.constant 0 : index
    %76 = vector.load %arg7[%c0_28, %c0_29, %c0_30] : memref<1x8x128xf32, #tpu.memory_space<vmem>>, vector<1x8x128xf32>
    %77 = vector.shape_cast %76 : vector<1x8x128xf32> to vector<8x128xf32>
    %78 = vector.shape_cast %75 : vector<8x128xf32> to vector<1x8x128xf32>
    tpu.vector_store %arg7[%c0_28, %c0_29, %c0_30], %78 {strides = array<i32>} : memref<1x8x128xf32, #tpu.memory_space<vmem>>, vector<1x8x128xf32>,
    %c0_31 = arith.constant 0 : index
    %c0_32 = arith.constant 0 : index
    %c0_33 = arith.constant 0 : index
    %79 = vector.load %arg8[%c0_31, %c0_32, %c0_33] : memref<1x128x128xf32, #tpu.memory_space<vmem>>, vector<1x128x128xf32>
    %80 = vector.shape_cast %79 : vector<1x128x128xf32> to vector<128x128xf32>
    %81 = arith.truncf %69 : vector<16x128xf32> to vector<16x128xbf16>
    %82 = arith.truncf %39 : vector<16x128xf32> to vector<16x128xbf16>
    %cst_34 = arith.constant dense<0.000000e+00> : vector<128x128xf32>
    %83 = tpu.matmul %81, %82, %cst_34 {dimension_numbers = #tpu.dot_dimension_numbers<[0], [0], [1], [1], [0, 1, 1, 1], [], []>} : vector<16x128xbf16>, vector<16x128xbf16>, vector<128x128xf32> -> vector<128x128xf32>
    %84 = arith.addf %80, %83 : vector<128x128xf32>
    %c0_35 = arith.constant 0 : index
    %c0_36 = arith.constant 0 : index
    %c0_37 = arith.constant 0 : index
    %85 = vector.load %arg8[%c0_35, %c0_36, %c0_37] : memref<1x128x128xf32, #tpu.memory_space<vmem>>, vector<1x128x128xf32>
    %86 = vector.shape_cast %85 : vector<1x128x128xf32> to vector<128x128xf32>
    %87 = vector.shape_cast %84 : vector<128x128xf32> to vector<1x128x128xf32>
    tpu.vector_store %arg8[%c0_35, %c0_36, %c0_37], %87 {strides = array<i32>} : memref<1x128x128xf32, #tpu.memory_space<vmem>>, vector<1x128x128xf32>,
    return
  }
  func.func @transform_0(%arg0: i32, %arg1: i32) -> (i32, i32, i32) {
    %c0_i32 = arith.constant 0 : i32
    %c0_i32_0 = arith.constant 0 : i32
    return %arg0, %arg1, %c0_i32 : i32, i32, i32
  }
  func.func @transform_1(%arg0: i32, %arg1: i32) -> (i32, i32) {
    %c0_i32 = arith.constant 0 : i32
    %c0_i32_0 = arith.constant 0 : i32
    %c0_i32_1 = arith.constant 0 : i32
    return %c0_i32, %c0_i32_0 : i32, i32
  }
  func.func @transform_2(%arg0: i32, %arg1: i32) -> (i32, i32) {
    %c0_i32 = arith.constant 0 : i32
    %c0_i32_0 = arith.constant 0 : i32
    %c0_i32_1 = arith.constant 0 : i32
    return %c0_i32, %c0_i32_0 : i32, i32
  }
  func.func @transform_3(%arg0: i32, %arg1: i32) -> (i32, i32) {
    %c0_i32 = arith.constant 0 : i32
    %c0_i32_0 = arith.constant 0 : i32
    %c0_i32_1 = arith.constant 0 : i32
    return %c0_i32, %c0_i32_0 : i32, i32
  }
  func.func @transform_4(%arg0: i32, %arg1: i32) -> (i32, i32, i32) {
    %c0_i32 = arith.constant 0 : i32
    %c0_i32_0 = arith.constant 0 : i32
    return %arg0, %arg1, %c0_i32 : i32, i32, i32
  }
  func.func @transform_5(%arg0: i32, %arg1: i32) -> (i32, i32, i32) {
    %c0_i32 = arith.constant 0 : i32
    %c0_i32_0 = arith.constant 0 : i32
    %c0_i32_1 = arith.constant 0 : i32
    return %arg0, %c0_i32, %c0_i32_0 : i32, i32, i32
  }
  func.func @transform_6(%arg0: i32, %arg1: i32) -> (i32, i32, i32) {
    %c0_i32 = arith.constant 0 : i32
    %c0_i32_0 = arith.constant 0 : i32
    %c0_i32_1 = arith.constant 0 : i32
    return %arg0, %c0_i32, %c0_i32_0 : i32, i32, i32
  }
}

</mosaic_0001>

<llo_original>
// kernel: tpu_custom_call.1
$region0: #{tpu_custom_call.1}
  #allocation0 [shape = 'u32[]', space=smem, size = 0x4, offset = 0x4, fixed_abs, tag = 'smem constant byte address 0x4 - core index']
  #allocation1 [shape = 'u32[144,128]{1,0:T(1,128)}', space=vmem, size = 0x12000, scoped, tag = 'internal scratch']
  %s0 = inlined_call_operand.hbm [shape: f32[2,16,256], index: 0, kind: input, shape index: {}]
  %s1 = inlined_call_operand.hbm [shape: f32[8,384], index: 1, kind: input, shape index: {}]
  %s2 = inlined_call_operand.hbm [shape: bf16[256,384], index: 2, kind: input, shape index: {}]
  %s3 = inlined_call_operand.hbm [shape: bf16[128,128], index: 3, kind: input, shape index: {}]
  %s4 = inlined_call_operand.hbm [shape: f32[2,16,384], index: 4, kind: output, shape index: {0}]
  %s5 = inlined_call_operand.hbm [shape: f32[2,8,128], index: 5, kind: output, shape index: {1}]
  %s6 = inlined_call_operand.hbm [shape: f32[2,128,128], index: 6, kind: output, shape index: {2}]
  %7 = xla_tuple %s4, %s5, %s6
  %s8 = sld [smem:[#allocation0]]
  $region85: #{tpu_custom_call.1} parent=0
    _
  %s10 = ssub.s32 1, %s8
  %s11 = scalar_select 0, %s10, %s8
  $region1: #{tpu_custom_call.1} parent=0
    #allocation2 [shape = 'u8[32768]{0}', space=vmem, size = 0x8000, scoped, tag = 'input window, operand 0']
    #allocation3 [shape = 's32[2]{0}', space=sflag, size = 0x8, scoped, tag = 'scoped memory for tpu_custom_call.1']
    #allocation4 [shape = 's32[2]{0}', space=sflag, size = 0x8, scoped, tag = 'scoped memory for tpu_custom_call.1']
    #allocation5 [shape = 'u8[12288]{0}', space=vmem, size = 0x3000, scoped, tag = 'input window, operand 1, single buffered']
    #allocation6 [shape = 's32[1]{0}', space=sflag, size = 0x4, scoped, tag = 'scoped memory for tpu_custom_call.1']
    #allocation7 [shape = 'u8[196608]{0}', space=vmem, size = 0x30000, scoped, tag = 'input window, operand 2, single buffered']
    #allocation8 [shape = 'u8[32768]{0}', space=vmem, size = 0x8000, scoped, tag = 'input window, operand 3, single buffered']
    #allocation9 [shape = 's32[1]{0}', space=sflag, size = 0x4, scoped, tag = 'scoped memory for tpu_custom_call.1']
    #allocation10 [shape = 'u8[49152]{0}', space=vmem, size = 0xc000, scoped, tag = 'output window, operand 0']
    #allocation11 [shape = 'u8[8192]{0}', space=vmem, size = 0x2000, scoped, tag = 'output window, operand 1']
    #allocation12 [shape = 's32[2]{0}', space=sflag, size = 0x8, scoped, tag = 'scoped memory for tpu_custom_call.1']
    #allocation13 [shape = 'u8[131072]{0}', space=vmem, size = 0x20000, scoped, tag = 'output window, operand 2']
    %12 = vsyncpa [#allocation3], 0
    %s13 = scalar_lea.sflag [#allocation3], 1
    %14 = vsyncpa %s13, 0
    %15 = vsyncpa [#allocation6], 0
    %16 = vsyncpa [#allocation9], 0
    %17 = vsyncpa [#allocation4], 0
    %s18 = scalar_lea.sflag [#allocation4], 1
    %19 = vsyncpa %s18, 0
    %20 = vsyncpa [#allocation12], 0
    %s21 = scalar_lea.sflag [#allocation12], 1
    %22 = vsyncpa %s21, 0
    loop: start=0, step=1, limit=4
    $region2: #{tpu_custom_call.1} parent=1 // loop_pre_header
      _
    $region3: #{tpu_custom_call.1} parent=1 // loop_header
      %s24 = sphi 0, %s28
      %p25 = scmp.ge.s32.totalorder %s24, 4
      %s31 = sphi 0, %s43
      %s32 = sphi 0, %s39
      %s33 = sphi 0, %s31
      %s34 = sphi 0, %s32
      %s35 = sphi 0, %s33
      %s36 = sphi 0, %s34
      %s48 = sphi 0, %s50
      %s51 = sphi 0, %s48
      %s52 = sphi 0, %s51
      %s68 = sphi 0, %s52
      %s72 = sphi 0, %s72
      %s74 = sphi 0, %s72
      %s75 = sphi 0, %s74
      %s89 = sphi 0, %s75
      %s93 = sphi 0, %s93
      %s95 = sphi 0, %s93
      %s96 = sphi 0, %s95
      %s110 = sphi 0, %s96
      %s114 = sphi 0, %s114
      %s116 = sphi 0, %s114
      %s117 = sphi 0, %s116
      %s131 = sphi 0, %s117
      %s139 = sphi 0, %s141
      %s142 = sphi 0, %s139
      %s143 = sphi 0, %s142
      %s159 = sphi 0, %s143
      %s165 = sphi 0, %s167
      %s168 = sphi 0, %s165
      %s169 = sphi 0, %s168
      %s185 = sphi 0, %s169
      %s191 = sphi 0, %s193
      %s194 = sphi 0, %s191
      %s195 = sphi 0, %s194
      %s211 = sphi 0, %s195
    $region4: #{tpu_custom_call.1} parent=1 // loop_header_branch
      %27 = sbr.rel (%p25) target = $region8
    $region5: #{tpu_custom_call.1} parent=1 // loop_body
      %s29 = ssub.s32 %s24, 1
      %s30 = ssub.s32 %s24, 2
      %s37 = sadd.s32 1, %s32
      %p38 = scmp.ge.s32.totalorder %s37, 1
      %s39 = scalar_select %p38, 0, %s37
      %s40 = sadd.s32 1, %s31
      %s41 = scalar_select %p38, %s40, %s31
      %p42 = scmp.ge.s32.totalorder %s41, 2
      %s43 = scalar_select %p42, 0, %s41
      %s44 = ssub.s32 %s31, %s43
      %s45 = ssub.s32 %s32, %s39
      %s46 = sor.u32 %s44, %s45
      %p47 = scmp.eq.s32.totalorder %s46, 0
      %s49 = sadd.s32 %s48, 1
      %s50 = scalar_select %p47, %s48, %s49
      %p53 = pneg %p47
      %p54 = scmp.eq.s32.totalorder %s24, 1
      %p55 = por %p53, %p54
      %p56 = scmp.ne.s32.totalorder %s48, %s51
      %p57 = scmp.eq.s32.totalorder %s24, 0
      %p58 = por %p56, %p57
      %p59 = scmp.ne.s32.totalorder %s48, %s51
      %p60 = scmp.eq.s32.totalorder %s29, 1
      %p61 = por %p59, %p60
      %p62 = scmp.ne.s32.totalorder %s51, %s52
      %p63 = scmp.eq.s32.totalorder %s29, 0
      %p64 = por %p62, %p63
      %p65 = scmp.ne.s32.totalorder %s51, %s52
      %p66 = scmp.eq.s32.totalorder %s30, 1
      %p67 = por %p65, %p66
      %p69 = scmp.ne.s32.totalorder %s52, %s68
      %p70 = scmp.eq.s32.totalorder %s30, 0
      %p71 = por %p69, %p70
      %s73 = sadd.s32 %s72, 1
      %p76 = scmp.eq.s32.totalorder %s24, 1
      %p77 = scmp.ne.s32.totalorder %s72, %s74
      %p78 = scmp.eq.s32.totalorder %s24, 0
      %p79 = por %p77, %p78
      %p80 = scmp.ne.s32.totalorder %s72, %s74
      %p81 = scmp.eq.s32.totalorder %s29, 1
      %p82 = por %p80, %p81
      %p83 = scmp.ne.s32.totalorder %s74, %s75
      %p84 = scmp.eq.s32.totalorder %s29, 0
      %p85 = por %p83, %p84
      %p86 = scmp.ne.s32.totalorder %s74, %s75
      %p87 = scmp.eq.s32.totalorder %s30, 1
      %p88 = por %p86, %p87
      %p90 = scmp.ne.s32.totalorder %s75, %s89
      %p91 = scmp.eq.s32.totalorder %s30, 0
      %p92 = por %p90, %p91
      %s94 = sadd.s32 %s93, 1
      %p97 = scmp.eq.s32.totalorder %s24, 1
      %p98 = scmp.ne.s32.totalorder %s93, %s95
      %p99 = scmp.eq.s32.totalorder %s24, 0
      %p100 = por %p98, %p99
      %p101 = scmp.ne.s32.totalorder %s93, %s95
      %p102 = scmp.eq.s32.totalorder %s29, 1
      %p103 = por %p101, %p102
      %p104 = scmp.ne.s32.totalorder %s95, %s96
      %p105 = scmp.eq.s32.totalorder %s29, 0
      %p106 = por %p104, %p105
      %p107 = scmp.ne.s32.totalorder %s95, %s96
      %p108 = scmp.eq.s32.totalorder %s30, 1
      %p109 = por %p107, %p108
      %p111 = scmp.ne.s32.totalorder %s96, %s110
      %p112 = scmp.eq.s32.totalorder %s30, 0
      %p113 = por %p111, %p112
      %s115 = sadd.s32 %s114, 1
      %p118 = scmp.eq.s32.totalorder %s24, 1
      %p119 = scmp.ne.s32.totalorder %s114, %s116
      %p120 = scmp.eq.s32.totalorder %s24, 0
      %p121 = por %p119, %p120
      %p122 = scmp.ne.s32.totalorder %s114, %s116
      %p123 = scmp.eq.s32.totalorder %s29, 1
      %p124 = por %p122, %p123
      %p125 = scmp.ne.s32.totalorder %s116, %s117
      %p126 = scmp.eq.s32.totalorder %s29, 0
      %p127 = por %p125, %p126
      %p128 = scmp.ne.s32.totalorder %s116, %s117
      %p129 = scmp.eq.s32.totalorder %s30, 1
      %p130 = por %p128, %p129
      %p132 = scmp.ne.s32.totalorder %s117, %s131
      %p133 = scmp.eq.s32.totalorder %s30, 0
      %p134 = por %p132, %p133
      %s135 = ssub.s32 %s31, %s43
      %s136 = ssub.s32 %s32, %s39
      %s137 = sor.u32 %s135, %s136
      %p138 = scmp.eq.s32.totalorder %s137, 0
      %s140 = sadd.s32 %s139, 1
      %s141 = scalar_select %p138, %s139, %s140
      %p144 = pneg %p138
      %p145 = scmp.eq.s32.totalorder %s24, 1
      %p146 = por %p144, %p145
      %p147 = scmp.ne.s32.totalorder %s139, %s142
      %p148 = scmp.eq.s32.totalorder %s24, 0
      %p149 = por %p147, %p148
      %p150 = scmp.ne.s32.totalorder %s139, %s142
      %p151 = scmp.eq.s32.totalorder %s29, 1
      %p152 = por %p150, %p151
      %p153 = scmp.ne.s32.totalorder %s142, %s143
      %p154 = scmp.eq.s32.totalorder %s29, 0
      %p155 = por %p153, %p154
      %p156 = scmp.ne.s32.totalorder %s142, %s143
      %p157 = scmp.eq.s32.totalorder %s30, 1
      %p158 = por %p156, %p157
      %p160 = scmp.ne.s32.totalorder %s143, %s159
      %p161 = scmp.eq.s32.totalorder %s30, 0
      %p162 = por %p160, %p161
      %s163 = ssub.s32 %s31, %s43
      %p164 = scmp.eq.s32.totalorder %s163, 0
      %s166 = sadd.s32 %s165, 1
      %s167 = scalar_select %p164, %s165, %s166
      %p170 = pneg %p164
      %p171 = scmp.eq.s32.totalorder %s24, 1
      %p172 = por %p170, %p171
      %p173 = scmp.ne.s32.totalorder %s165, %s168
      %p174 = scmp.eq.s32.totalorder %s24, 0
      %p175 = por %p173, %p174
      %p176 = scmp.ne.s32.totalorder %s165, %s168
      %p177 = scmp.eq.s32.totalorder %s29, 1
      %p178 = por %p176, %p177
      %p179 = scmp.ne.s32.totalorder %s168, %s169
      %p180 = scmp.eq.s32.totalorder %s29, 0
      %p181 = por %p179, %p180
      %p182 = scmp.ne.s32.totalorder %s168, %s169
      %p183 = scmp.eq.s32.totalorder %s30, 1
      %p184 = por %p182, %p183
      %p186 = scmp.ne.s32.totalorder %s169, %s185
      %p187 = scmp.eq.s32.totalorder %s30, 0
      %p188 = por %p186, %p187
      %s189 = ssub.s32 %s31, %s43
      %p190 = scmp.eq.s32.totalorder %s189, 0
      %s192 = sadd.s32 %s191, 1
      %s193 = scalar_select %p190, %s191, %s192
      %p196 = pneg %p190
      %p197 = scmp.eq.s32.totalorder %s24, 1
      %p198 = por %p196, %p197
      %p199 = scmp.ne.s32.totalorder %s191, %s194
      %p200 = scmp.eq.s32.totalorder %s24, 0
      %p201 = por %p199, %p200
      %p202 = scmp.ne.s32.totalorder %s191, %s194
      %p203 = scmp.eq.s32.totalorder %s29, 1
      %p204 = por %p202, %p203
      %p205 = scmp.ne.s32.totalorder %s194, %s195
      %p206 = scmp.eq.s32.totalorder %s29, 0
      %p207 = por %p205, %p206
      %p208 = scmp.ne.s32.totalorder %s194, %s195
      %p209 = scmp.eq.s32.totalorder %s30, 1
      %p210 = por %p208, %p209
      %p212 = scmp.ne.s32.totalorder %s195, %s211
      %p213 = scmp.eq.s32.totalorder %s30, 0
      %p214 = por %p212, %p213
      %p215 = scmp.le.s32.totalorder 1, %s24
      %p216 = scmp.lt.s32.totalorder %s24, 3
      %p217 = pnand %p215, %p216
      %p218 = pneg %p217
      // Predicated region
      $region9: #{tpu_custom_call.1} parent=5 // pred_check
        _
      $region10: #{tpu_custom_call.1} parent=5 // pred_check_branch
        %220 = sbr.rel (%p217) target = $region12
      $region11: #{tpu_custom_call.1} parent=5 // pred_region
        %s221 = ssub.s32 %s24, 1
        // Predicated region
        $region13: #{tpu_custom_call.1} parent=11 // pred_check
          %p222 = pneg %p85
        $region14: #{tpu_custom_call.1} parent=11 // pred_check_branch
          %224 = sbr.rel (%p222) target = $region16
        $region15: #{tpu_custom_call.1} parent=11 // pred_region
          %s226 = ssub.s32 384, 384
          %227 = vsyncadd [#allocation6], %s226
          %s229 = sshll.u32 [#allocation5], 4
          %s230 = int_to_ptr.vmem [resolvable:$true] %s229
          %232 = dma.hbm_to_vmem [thread:$0]  %s1, 384, %s230, [#allocation6]
        $region16: #{tpu_custom_call.1} parent=11 // pred_fallthru
          _
        // Predicated region
        $region17: #{tpu_custom_call.1} parent=11 // pred_check
          %p233 = pneg %p106
        $region18: #{tpu_custom_call.1} parent=11 // pred_check_branch
          %235 = sbr.rel (%p233) target = $region20
        $region19: #{tpu_custom_call.1} parent=11 // pred_region
          %s237 = ssub.s32 6144, 6144
          %238 = vsyncadd [#allocation6], %s237
          %s239 = sshll.u32 [#allocation7], 4
          %s240 = int_to_ptr.vmem [resolvable:$true] %s239
          %245 = dma.hbm_to_vmem [thread:$0]  %s2, 6144, %s240, [#allocation6], 192, 192, 12
        $region20: #{tpu_custom_call.1} parent=11 // pred_fallthru
          _
        // Predicated region
        $region21: #{tpu_custom_call.1} parent=11 // pred_check
          %p246 = pneg %p127
        $region22: #{tpu_custom_call.1} parent=11 // pred_check_branch
          %248 = sbr.rel (%p246) target = $region24
        $region23: #{tpu_custom_call.1} parent=11 // pred_region
          %s250 = ssub.s32 1024, 1024
          %251 = vsyncadd [#allocation9], %s250
          %s252 = sshll.u32 [#allocation8], 4
          %s253 = int_to_ptr.vmem [resolvable:$true] %s252
          %258 = dma.hbm_to_vmem [thread:$0]  %s3, 1024, %s253, [#allocation9], 64, 64, 4
        $region24: #{tpu_custom_call.1} parent=11 // pred_fallthru
          _
      $region12: #{tpu_custom_call.1} parent=5 // pred_fallthru
        _
      %p259 = scmp.lt.s32.totalorder %s24, 2
      // Predicated region
      $region25: #{tpu_custom_call.1} parent=5 // pred_check
        %p260 = pneg %p259
      $region26: #{tpu_custom_call.1} parent=5 // pred_check_branch
        %262 = sbr.rel (%p260) target = $region28
      $region27: #{tpu_custom_call.1} parent=5 // pred_region
        // Predicated region
        $region29: #{tpu_custom_call.1} parent=27 // pred_check
          %p263 = pneg %p58
        $region30: #{tpu_custom_call.1} parent=27 // pred_check_branch
          %265 = sbr.rel (%p263) target = $region32
        $region31: #{tpu_custom_call.1} parent=27 // pred_region
          %s266 = sand.u32 %s48, 1
          %s267 = scalar_lea.sflag [#allocation3], %s266
          %s268 = sand.u32 %s48, 1
          %s269 = smul.addr %s268, 32
          %s270 = scalar_lea.vmem [#allocation2], %s269
          %s271 = smul.u32 2, %s32
          %s273 = ssub.s32 512, 512
          %274 = vsyncadd %s267, %s273
          %s275 = smul.addr %s271, 2
          %s276 = smul.addr %s31, 4
          %s277 = sadd.s32 %s275, %s276
          %s278 = smul.addr %s277, 128
          %s279 = scalar_lea.hbm %s0, %s278
          %s280 = sshll.u32 %s270, 4
          %s281 = int_to_ptr.vmem [resolvable:$true] %s280
          %286 = dma.hbm_to_vmem [thread:$0]  %s279, 512, %s281, %s267, 256, 256, 16
        $region32: #{tpu_custom_call.1} parent=27 // pred_fallthru
          _
      $region28: #{tpu_custom_call.1} parent=5 // pred_fallthru
        _
      %p287 = scmp.le.s32.totalorder 1, %s24
      %p288 = scmp.lt.s32.totalorder %s24, 3
      %p289 = pnand %p287, %p288
      %p290 = pneg %p289
      // Predicated region
      $region33: #{tpu_custom_call.1} parent=5 // pred_check
        _
      $region34: #{tpu_custom_call.1} parent=5 // pred_check_branch
        %292 = sbr.rel (%p289) target = $region36
      $region35: #{tpu_custom_call.1} parent=5 // pred_region
        %s293 = ssub.s32 %s24, 1
        %s294 = sand.u32 %s51, 1
        %s295 = scalar_lea.sflag [#allocation3], %s294
        %s296 = sand.u32 %s51, 1
        %s297 = smul.addr %s296, 32
        %s298 = scalar_lea.vmem [#allocation2], %s297
        // Predicated region
        $region37: #{tpu_custom_call.1} parent=35 // pred_check
          %p299 = pneg %p64
        $region38: #{tpu_custom_call.1} parent=35 // pred_check_branch
          %301 = sbr.rel (%p299) target = $region40
        $region39: #{tpu_custom_call.1} parent=35 // pred_region
          %302 = dma.done %s295, 512
        $region40: #{tpu_custom_call.1} parent=35 // pred_fallthru
          _
        // Predicated region
        $region41: #{tpu_custom_call.1} parent=35 // pred_check
          %p303 = pneg %p85
        $region42: #{tpu_custom_call.1} parent=35 // pred_check_branch
          %305 = sbr.rel (%p303) target = $region44
        $region43: #{tpu_custom_call.1} parent=35 // pred_region
          %306 = dma.done [#allocation6], 384
        $region44: #{tpu_custom_call.1} parent=35 // pred_fallthru
          _
        // Predicated region
        $region45: #{tpu_custom_call.1} parent=35 // pred_check
          %p307 = pneg %p106
        $region46: #{tpu_custom_call.1} parent=35 // pred_check_branch
          %309 = sbr.rel (%p307) target = $region48
        $region47: #{tpu_custom_call.1} parent=35 // pred_region
          %310 = dma.done [#allocation6], 6144
        $region48: #{tpu_custom_call.1} parent=35 // pred_fallthru
          _
        // Predicated region
        $region49: #{tpu_custom_call.1} parent=35 // pred_check
          %p311 = pneg %p127
        $region50: #{tpu_custom_call.1} parent=35 // pred_check_branch
          %313 = sbr.rel (%p311) target = $region52
        $region51: #{tpu_custom_call.1} parent=35 // pred_region
          %314 = dma.done [#allocation9], 1024
        $region52: #{tpu_custom_call.1} parent=35 // pred_fallthru
          _
        %s315 = sand.u32 %s51, 1
        %s316 = scalar_lea.sflag [#allocation3], %s315
        %s317 = sand.u32 %s51, 1
        %s318 = smul.addr %s317, 32
        %s319 = scalar_lea.vmem [#allocation2], %s318
        %p320 = pneg %p64
        %p321 = pneg %p61
        %p322 = pneg %p85
        %p323 = pneg %p82
        %p324 = pneg %p106
        %p325 = pneg %p103
        %p326 = pneg %p127
        %p327 = pneg %p124
        %p328 = pneg %p155
        %p329 = pneg %p152
        %s330 = sand.u32 %s142, 1
        %s331 = scalar_lea.sflag [#allocation4], %s330
        %s332 = sand.u32 %s142, 1
        %s333 = smul.addr %s332, 48
        %s334 = scalar_lea.vmem [#allocation10], %s333
        %p335 = pneg %p181
        %p336 = pneg %p178
        %s337 = sand.u32 %s29, 1
        %s338 = scalar_lea.sflag [#allocation12], %s337
        %s339 = sand.u32 %s168, 1
        %s340 = smul.addr %s339, 8
        %s341 = scalar_lea.vmem [#allocation11], %s340
        %p342 = pneg %p207
        %p343 = pneg %p204
        %s344 = sand.u32 %s29, 1
        %s345 = scalar_lea.sflag [#allocation12], %s344
        %s346 = sand.u32 %s194, 1
        %s347 = smul.addr %s346, 128
        %s348 = scalar_lea.vmem [#allocation13], %s347
        %s349 = smul.u32 2, %s34
        %s350 = smul.u32 2, %s34
        %p352 = scmp.eq.s32.totalorder %s34, 0
        // Predicated region
        $region53: #{tpu_custom_call.1} parent=35 // pred_check
          %p353 = pneg %p352
        $region54: #{tpu_custom_call.1} parent=35 // pred_check_branch
          %355 = sbr.rel (%p353) target = $region56
        $region55: #{tpu_custom_call.1} parent=35 // pred_region
          %356 = vst [vmem:[%s341] sm:$0xff] 0.0
          %357 = vst [vmem:[%s348] sm:$0xff] 0.0
          %358 = vst [vmem:[%s348 + $0x8] sm:$0xff] 0.0
          %359 = vst [vmem:[%s348 + $0x10] sm:$0xff] 0.0
          %360 = vst [vmem:[%s348 + $0x18] sm:$0xff] 0.0
          %361 = vst [vmem:[%s348 + $0x20] sm:$0xff] 0.0
          %362 = vst [vmem:[%s348 + $0x28] sm:$0xff] 0.0
          %363 = vst [vmem:[%s348 + $0x30] sm:$0xff] 0.0
          %364 = vst [vmem:[%s348 + $0x38] sm:$0xff] 0.0
          %365 = vst [vmem:[%s348 + $0x40] sm:$0xff] 0.0
          %366 = vst [vmem:[%s348 + $0x48] sm:$0xff] 0.0
          %367 = vst [vmem:[%s348 + $0x50] sm:$0xff] 0.0
          %368 = vst [vmem:[%s348 + $0x58] sm:$0xff] 0.0
          %369 = vst [vmem:[%s348 + $0x60] sm:$0xff] 0.0
          %370 = vst [vmem:[%s348 + $0x68] sm:$0xff] 0.0
          %371 = vst [vmem:[%s348 + $0x70] sm:$0xff] 0.0
          %372 = vst [vmem:[%s348 + $0x78] sm:$0xff] 0.0
        $region56: #{tpu_custom_call.1} parent=35 // pred_fallthru
          _
        %v373 = vld [vmem:[%s298] sm:$0xff]
        %v374 = vld [vmem:[%s298 + $0x8] sm:$0xff]
        %v375 = vld [vmem:[%s298 + $0x10] sm:$0xff]
        %v376 = vld [vmem:[%s298 + $0x18] sm:$0xff]
        %v377 = vld [vmem:[#allocation5] ss:$8 sm:$0x3]
        %s378 = scalar_lea.vmem [#allocation5], 1
        %v379 = vld [vmem:[%s378] ss:$8 sm:$0x3]
        %s380 = scalar_lea.vmem [#allocation5], 2
        %v381 = vld [vmem:[%s380] ss:$8 sm:$0x7]
        %v382 = vadd.f32 %v373, %v374
        %383 = vadd.xlane.f32.xlu0 %v382
        %v384 = vpop.xlane.xlu0 %383
        %v385 = vadd.f32 %v375, %v376
        %386 = vadd.xlane.f32.xlu0 %v385
        %v387 = vpop.xlane.xlu0 %386
        %v388 = vmul.f32 %v373, %v373
        %v389 = vmul.f32 %v374, %v374
        %v390 = vmul.f32 %v375, %v375
        %v391 = vmul.f32 %v376, %v376
        %v392 = vadd.f32 %v388, %v389
        %393 = vadd.xlane.f32.xlu0 %v392
        %v394 = vpop.xlane.xlu0 %393
        %v395 = vadd.f32 %v390, %v391
        %396 = vadd.xlane.f32.xlu0 %v395
        %v397 = vpop.xlane.xlu0 %396
        %v398 = vmul.f32 %v384, 0.006802721
        %v399 = vmul.f32 %v387, 0.006802721
        %v400 = vmul.f32 %v394, 0.006802721
        %v401 = vmul.f32 %v397, 0.006802721
        %v402 = vmul.f32 %v398, %v398
        %v403 = vmul.f32 %v399, %v399
        %v404 = vsub.f32 %v400, %v402
        %v405 = vsub.f32 %v401, %v403
        %v406 = vsub.f32 %v373, %v398
        %v407 = vsub.f32 %v374, %v398
        %v408 = vsub.f32 %v375, %v399
        %v409 = vsub.f32 %v376, %v399
        %v410 = vadd.f32 %v404, 1e-05
        %v411 = vadd.f32 %v405, 1e-05
        %v412 = vrsqrt.pop %v410
        %v413 = vrsqrt.pop %v411
        %v414 = vmul.f32 %v406, %v412
        %v415 = vmul.f32 %v407, %v412
        %v416 = vmul.f32 %v408, %v413
        %v417 = vmul.f32 %v409, %v413
        %v419 = vlaneseq
        %v420 = vshrl.u32 %v419, 7
        %v421 = vsub.s32 0, %v420
        %v422 = vrot.slane %v377, %v421
        %v423 = vlaneseq
        %v424 = vshrl.u32 %v423, 7
        %v425 = vsub.s32 1, %v424
        %v426 = vrot.slane %v377, %v425
        %v429 = vmul.f32 %v414, %v422
        %v430 = vmul.f32 %v415, %v426
        %v431 = vmul.f32 %v416, %v422
        %v432 = vmul.f32 %v417, %v426
        %v434 = vlaneseq
        %v435 = vshrl.u32 %v434, 7
        %v436 = vsub.s32 0, %v435
        %v437 = vrot.slane %v379, %v436
        %v438 = vlaneseq
        %v439 = vshrl.u32 %v438, 7
        %v440 = vsub.s32 1, %v439
        %v441 = vrot.slane %v379, %v440
        %v444 = vadd.f32 %v429, %v437
        %v445 = vadd.f32 %v430, %v441
        %v446 = vadd.f32 %v431, %v437
        %v447 = vadd.f32 %v432, %v441
        %v448 = vpack.c.bf16 %v446, %v444
        %v449 = vpack.c.bf16 %v447, %v445
        %v450 = vld [vmem:[#allocation7] sm:$0xff]
        %v451 = vld [vmem:[#allocation7 + $0x8] sm:$0xf]
        %v452 = vld [vmem:[#allocation7 + $0xc] sm:$0xff]
        %v453 = vld [vmem:[#allocation7 + $0x14] sm:$0xf]
        %v454 = vld [vmem:[#allocation7 + $0x18] sm:$0xff]
        %v455 = vld [vmem:[#allocation7 + $0x20] sm:$0xf]
        %v456 = vld [vmem:[#allocation7 + $0x24] sm:$0xff]
        %v457 = vld [vmem:[#allocation7 + $0x2c] sm:$0xf]
        %v458 = vld [vmem:[#allocation7 + $0x30] sm:$0xff]
        %v459 = vld [vmem:[#allocation7 + $0x38] sm:$0xf]
        %v460 = vld [vmem:[#allocation7 + $0x3c] sm:$0xff]
        %v461 = vld [vmem:[#allocation7 + $0x44] sm:$0xf]
        %v462 = vld [vmem:[#allocation7 + $0x48] sm:$0xff]
        %v463 = vld [vmem:[#allocation7 + $0x50] sm:$0xf]
        %v464 = vld [vmem:[#allocation7 + $0x54] sm:$0xff]
        %v465 = vld [vmem:[#allocation7 + $0x5c] sm:$0xf]
        %v466 = vld [vmem:[#allocation7 + $0x60] sm:$0xff]
        %v467 = vld [vmem:[#allocation7 + $0x68] sm:$0xf]
        %v468 = vld [vmem:[#allocation7 + $0x6c] sm:$0xff]
        %v469 = vld [vmem:[#allocation7 + $0x74] sm:$0xf]
        %v470 = vld [vmem:[#allocation7 + $0x78] sm:$0xff]
        %v471 = vld [vmem:[#allocation7 + $0x80] sm:$0xf]
        %v472 = vld [vmem:[#allocation7 + $0x84] sm:$0xff]
        %v473 = vld [vmem:[#allocation7 + $0x8c] sm:$0xf]
        %v474 = vld [vmem:[#allocation7 + $0x90] sm:$0xff]
        %v475 = vld [vmem:[#allocation7 + $0x98] sm:$0xf]
        %v476 = vld [vmem:[#allocation7 + $0x9c] sm:$0xff]
        %v477 = vld [vmem:[#allocation7 + $0xa4] sm:$0xf]
        %v478 = vld [vmem:[#allocation7 + $0xa8] sm:$0xff]
        %v479 = vld [vmem:[#allocation7 + $0xb0] sm:$0xf]
        %v480 = vld [vmem:[#allocation7 + $0xb4] sm:$0xff]
        %v481 = vld [vmem:[#allocation7 + $0xbc] sm:$0xf]
        %v482 = vld [vmem:[#allocation7 + $0xc0] sm:$0xff]
        %v483 = vld [vmem:[#allocation7 + $0xc8] sm:$0xf]
        %v484 = vld [vmem:[#allocation7 + $0xcc] sm:$0xff]
        %v485 = vld [vmem:[#allocation7 + $0xd4] sm:$0xf]
        %v486 = vld [vmem:[#allocation7 + $0xd8] sm:$0xff]
        %v487 = vld [vmem:[#allocation7 + $0xe0] sm:$0xf]
        %v488 = vld [vmem:[#allocation7 + $0xe4] sm:$0xff]
        %v489 = vld [vmem:[#allocation7 + $0xec] sm:$0xf]
        %v490 = vld [vmem:[#allocation7 + $0xf0] sm:$0xff]
        %v491 = vld [vmem:[#allocation7 + $0xf8] sm:$0xf]
        %v492 = vld [vmem:[#allocation7 + $0xfc] sm:$0xff]
        %v493 = vld [vmem:[#allocation7 + $0x104] sm:$0xf]
        %v494 = vld [vmem:[#allocation7 + $0x108] sm:$0xff]
        %v495 = vld [vmem:[#allocation7 + $0x110] sm:$0xf]
        %v496 = vld [vmem:[#allocation7 + $0x114] sm:$0xff]
        %v497 = vld [vmem:[#allocation7 + $0x11c] sm:$0xf]
        %v498 = vld [vmem:[#allocation7 + $0x120] sm:$0xff]
        %v499 = vld [vmem:[#allocation7 + $0x128] sm:$0xf]
        %v500 = vld [vmem:[#allocation7 + $0x12c] sm:$0xff]
        %v501 = vld [vmem:[#allocation7 + $0x134] sm:$0xf]
        %v502 = vld [vmem:[#allocation7 + $0x138] sm:$0xff]
        %v503 = vld [vmem:[#allocation7 + $0x140] sm:$0xf]
        %v504 = vld [vmem:[#allocation7 + $0x144] sm:$0xff]
        %v505 = vld [vmem:[#allocation7 + $0x14c] sm:$0xf]
        %v506 = vld [vmem:[#allocation7 + $0x150] sm:$0xff]
        %v507 = vld [vmem:[#allocation7 + $0x158] sm:$0xf]
        %v508 = vld [vmem:[#allocation7 + $0x15c] sm:$0xff]
        %v509 = vld [vmem:[#allocation7 + $0x164] sm:$0xf]
        %v510 = vld [vmem:[#allocation7 + $0x168] sm:$0xff]
        %v511 = vld [vmem:[#allocation7 + $0x170] sm:$0xf]
        %v512 = vld [vmem:[#allocation7 + $0x174] sm:$0xff]
        %v513 = vld [vmem:[#allocation7 + $0x17c] sm:$0xf]
        %v515 = vlaneseq
        %v516 = vshrl.u32 %v515, 7
        %v517 = vsub.s32 0, %v516
        %v518 = vrot.slane %v381, %v517
        %v519 = vlaneseq
        %v520 = vshrl.u32 %v519, 7
        %v521 = vsub.s32 1, %v520
        %v522 = vrot.slane %v381, %v521
        %v523 = vlaneseq
        %v524 = vshrl.u32 %v523, 7
        %v525 = vsub.s32 2, %v524
        %v526 = vrot.slane %v381, %v525
        %v594 = vunpack.c.l.b16 %v450
        %v595 = vunpack.c.h.b16 %v450
        %v596 = vunpack.c.l.b16 %v451
        %v597 = vunpack.c.l.b16 %v452
        %v598 = vunpack.c.h.b16 %v452
        %v599 = vunpack.c.l.b16 %v453
        %v600 = vunpack.c.l.b16 %v454
        %v601 = vunpack.c.h.b16 %v454
        %v602 = vunpack.c.l.b16 %v455
        %v603 = vunpack.c.l.b16 %v456
        %v604 = vunpack.c.h.b16 %v456
        %v605 = vunpack.c.l.b16 %v457
        %v606 = vunpack.c.l.b16 %v458
        %v607 = vunpack.c.h.b16 %v458
        %v608 = vunpack.c.l.b16 %v459
        %v609 = vunpack.c.l.b16 %v460
        %v610 = vunpack.c.h.b16 %v460
        %v611 = vunpack.c.l.b16 %v461
        %v612 = vunpack.c.l.b16 %v462
        %v613 = vunpack.c.h.b16 %v462
        %v614 = vunpack.c.l.b16 %v463
        %v615 = vunpack.c.l.b16 %v464
        %v616 = vunpack.c.h.b16 %v464
        %v617 = vunpack.c.l.b16 %v465
        %v618 = vunpack.c.l.b16 %v466
        %v619 = vunpack.c.h.b16 %v466
        %v620 = vunpack.c.l.b16 %v467
        %v621 = vunpack.c.l.b16 %v468
        %v622 = vunpack.c.h.b16 %v468
        %v623 = vunpack.c.l.b16 %v469
        %v624 = vunpack.c.l.b16 %v470
        %v625 = vunpack.c.h.b16 %v470
        %v626 = vunpack.c.l.b16 %v471
        %v627 = vunpack.c.l.b16 %v472
        %v628 = vunpack.c.h.b16 %v472
        %v629 = vunpack.c.l.b16 %v473
        %v630 = vunpack.c.l.b16 %v474
        %v631 = vunpack.c.h.b16 %v474
        %v632 = vunpack.c.l.b16 %v475
        %v633 = vunpack.c.l.b16 %v476
        %v634 = vunpack.c.h.b16 %v476
        %v635 = vunpack.c.l.b16 %v477
        %v636 = vunpack.c.l.b16 %v478
        %v637 = vunpack.c.h.b16 %v478
        %v638 = vunpack.c.l.b16 %v479
        %v639 = vunpack.c.l.b16 %v480
        %v640 = vunpack.c.h.b16 %v480
        %v641 = vunpack.c.l.b16 %v481
        %v642 = vunpack.c.l.b16 %v482
        %v643 = vunpack.c.h.b16 %v482
        %v644 = vunpack.c.l.b16 %v483
        %v645 = vunpack.c.l.b16 %v484
        %v646 = vunpack.c.h.b16 %v484
        %v647 = vunpack.c.l.b16 %v485
        %v648 = vunpack.c.l.b16 %v486
        %v649 = vunpack.c.h.b16 %v486
        %v650 = vunpack.c.l.b16 %v487
        %v651 = vunpack.c.l.b16 %v488
        %v652 = vunpack.c.h.b16 %v488
        %v653 = vunpack.c.l.b16 %v489
        %v654 = vunpack.c.l.b16 %v490
        %v655 = vunpack.c.h.b16 %v490
        %v656 = vunpack.c.l.b16 %v491
        %v657 = vunpack.c.l.b16 %v492
        %v658 = vunpack.c.h.b16 %v492
        %v659 = vunpack.c.l.b16 %v493
        %v660 = vunpack.c.l.b16 %v494
        %v661 = vunpack.c.h.b16 %v494
        %v662 = vunpack.c.l.b16 %v495
        %v663 = vunpack.c.l.b16 %v496
        %v664 = vunpack.c.h.b16 %v496
        %v665 = vunpack.c.l.b16 %v497
        %v666 = vunpack.c.l.b16 %v498
        %v667 = vunpack.c.h.b16 %v498
        %v668 = vunpack.c.l.b16 %v499
        %v669 = vunpack.c.l.b16 %v500
        %v670 = vunpack.c.h.b16 %v500
        %v671 = vunpack.c.l.b16 %v501
        %v672 = vunpack.c.l.b16 %v502
        %v673 = vunpack.c.h.b16 %v502
        %v674 = vunpack.c.l.b16 %v503
        %v675 = vunpack.c.l.b16 %v504
        %v676 = vunpack.c.h.b16 %v504
        %v677 = vunpack.c.l.b16 %v505
        %v678 = vunpack.c.l.b16 %v506
        %v679 = vunpack.c.h.b16 %v506
        %v680 = vunpack.c.l.b16 %v507
        %v681 = vunpack.c.l.b16 %v508
        %v682 = vunpack.c.h.b16 %v508
        %v683 = vunpack.c.l.b16 %v509
        %v684 = vunpack.c.l.b16 %v510
        %v685 = vunpack.c.h.b16 %v510
        %v686 = vunpack.c.l.b16 %v511
        %v687 = vunpack.c.l.b16 %v512
        %v688 = vunpack.c.h.b16 %v512
        %v689 = vunpack.c.l.b16 %v513
        %v690 = vpack.c.b16 %v597, %v594
        %v691 = vpack.c.b16 %v598, %v595
        %v692 = vpack.c.b16 %v599, %v596
        %v693 = vpack.c.b16 %v603, %v600
        %v694 = vpack.c.b16 %v604, %v601
        %v695 = vpack.c.b16 %v605, %v602
        %v696 = vpack.c.b16 %v609, %v606
        %v697 = vpack.c.b16 %v610, %v607
        %v698 = vpack.c.b16 %v611, %v608
        %v699 = vpack.c.b16 %v615, %v612
        %v700 = vpack.c.b16 %v616, %v613
        %v701 = vpack.c.b16 %v617, %v614
        %v702 = vpack.c.b16 %v621, %v618
        %v703 = vpack.c.b16 %v622, %v619
        %v704 = vpack.c.b16 %v623, %v620
        %v705 = vpack.c.b16 %v627, %v624
        %v706 = vpack.c.b16 %v628, %v625
        %v707 = vpack.c.b16 %v629, %v626
        %v708 = vpack.c.b16 %v633, %v630
        %v709 = vpack.c.b16 %v634, %v631
        %v710 = vpack.c.b16 %v635, %v632
        %v711 = vpack.c.b16 %v639, %v636
        %v712 = vpack.c.b16 %v640, %v637
        %v713 = vpack.c.b16 %v641, %v638
        %v714 = vpack.c.b16 %v645, %v642
        %v715 = vpack.c.b16 %v646, %v643
        %v716 = vpack.c.b16 %v647, %v644
        %v717 = vpack.c.b16 %v651, %v648
        %v718 = vpack.c.b16 %v652, %v649
        %v719 = vpack.c.b16 %v653, %v650
        %v720 = vpack.c.b16 %v657, %v654
        %v721 = vpack.c.b16 %v658, %v655
        %v722 = vpack.c.b16 %v659, %v656
        %v723 = vpack.c.b16 %v663, %v660
        %v724 = vpack.c.b16 %v664, %v661
        %v725 = vpack.c.b16 %v665, %v662
        %v726 = vpack.c.b16 %v669, %v666
        %v727 = vpack.c.b16 %v670, %v667
        %v728 = vpack.c.b16 %v671, %v668
        %v729 = vpack.c.b16 %v675, %v672
        %v730 = vpack.c.b16 %v676, %v673
        %v731 = vpack.c.b16 %v677, %v674
        %v732 = vpack.c.b16 %v681, %v678
        %v733 = vpack.c.b16 %v682, %v679
        %v734 = vpack.c.b16 %v683, %v680
        %v735 = vpack.c.b16 %v687, %v684
        %v736 = vpack.c.b16 %v688, %v685
        %v737 = vpack.c.b16 %v689, %v686
        %786 = vmatprep.subr.bf16.mxu0 %v691
        %787 = vmatpush1.bf16.msra.mxu0 %v690
        %788 = vmatprep.subr.bf16.mxu0 %v694
        %789 = vmatpush1.bf16.msra.mxu0 %v693
        %790 = vmatprep.subr.bf16.mxu0 %v697
        %791 = vmatpush1.bf16.msra.mxu0 %v696
        %792 = vmatprep.subr.bf16.mxu0 %v700
        %793 = vmatpush1.bf16.msra.mxu0 %v699
        %794 = vmatprep.subr.bf16.mxu0 %v703
        %795 = vmatpush1.bf16.msra.mxu0 %v702
        %796 = vmatprep.subr.bf16.mxu0 %v706
        %797 = vmatpush1.bf16.msra.mxu0 %v705
        %798 = vmatprep.subr.bf16.mxu0 %v709
        %799 = vmatpush1.bf16.msra.mxu0 %v708
        %800 = vmatprep.subr.bf16.mxu0 %v712
        %801 = vmatpush1.bf16.msra.mxu0 %v711
        %802 = vmatprep.subr.bf16.mxu0 %v715
        %803 = vmatpush1.bf16.msra.mxu0 %v714
        %804 = vmatprep.subr.bf16.mxu0 %v718
        %805 = vmatpush1.bf16.msra.mxu0 %v717
        %806 = vmatprep.subr.bf16.mxu0 %v721
        %807 = vmatpush1.bf16.msra.mxu0 %v720
        %808 = vmatprep.subr.bf16.mxu0 %v724
        %809 = vmatpush1.bf16.msra.mxu0 %v723
        %810 = vmatprep.subr.bf16.mxu0 %v727
        %811 = vmatpush1.bf16.msra.mxu0 %v726
        %812 = vmatprep.subr.bf16.mxu0 %v730
        %813 = vmatpush1.bf16.msra.mxu0 %v729
        %814 = vmatprep.subr.bf16.mxu0 %v733
        %815 = vmatpush1.bf16.msra.mxu0 %v732
        %816 = vmatprep.subr.bf16.mxu0 %v736
        %817 = vmatpush1.bf16.msra.mxu0 %v735
        %818 = vmatprep.mubr.bf16.mxu0 %v449
        %819 = vmatmul.mubr.bf16.gmra.mrb[0].mxu0 %v448
        %v820 = vpop.f32.mrb[0].mxu0
        %v821 = vadd.f32 %v518, %v820
        %v822 = vpop.f32.mrb[0].mxu0
        %v823 = vadd.f32 %v522, %v822
        %v824 = vpop.f32.mrb[0].mxu0
        %v825 = vadd.f32 %v518, %v824
        %v826 = vpop.f32.mrb[0].mxu0
        %v827 = vadd.f32 %v522, %v826
        %828 = vdwg.mxu0
        %829 = vmatprep.subr.bf16.mxu0 0
        %830 = vmatpush1.bf16.msra.mxu0 %v692
        %831 = vmatprep.subr.bf16.mxu0 0
        %832 = vmatpush1.bf16.msra.mxu0 %v695
        %833 = vmatprep.subr.bf16.mxu0 0
        %834 = vmatpush1.bf16.msra.mxu0 %v698
        %835 = vmatprep.subr.bf16.mxu0 0
        %836 = vmatpush1.bf16.msra.mxu0 %v701
        %837 = vmatprep.subr.bf16.mxu0 0
        %838 = vmatpush1.bf16.msra.mxu0 %v704
        %839 = vmatprep.subr.bf16.mxu0 0
        %840 = vmatpush1.bf16.msra.mxu0 %v707
        %841 = vmatprep.subr.bf16.mxu0 0
        %842 = vmatpush1.bf16.msra.mxu0 %v710
        %843 = vmatprep.subr.bf16.mxu0 0
        %844 = vmatpush1.bf16.msra.mxu0 %v713
        %845 = vmatprep.subr.bf16.mxu0 0
        %846 = vmatpush1.bf16.msra.mxu0 %v716
        %847 = vmatprep.subr.bf16.mxu0 0
        %848 = vmatpush1.bf16.msra.mxu0 %v719
        %849 = vmatprep.subr.bf16.mxu0 0
        %850 = vmatpush1.bf16.msra.mxu0 %v722
        %851 = vmatprep.subr.bf16.mxu0 0
        %852 = vmatpush1.bf16.msra.mxu0 %v725
        %853 = vmatprep.subr.bf16.mxu0 0
        %854 = vmatpush1.bf16.msra.mxu0 %v728
        %855 = vmatprep.subr.bf16.mxu0 0
        %856 = vmatpush1.bf16.msra.mxu0 %v731
        %857 = vmatprep.subr.bf16.mxu0 0
        %858 = vmatpush1.bf16.msra.mxu0 %v734
        %859 = vmatprep.subr.bf16.mxu0 0
        %860 = vmatpush1.bf16.msra.mxu0 %v737
        %861 = vmatprep.mubr.bf16.mxu0 %v449
        %862 = vmatmul.mubr.bf16.gmra.mrb[0].mxu0 %v448
        %v863 = vpop.f32.mrb[0].mxu0
        %v864 = vadd.f32 %v526, %v863
        %v865 = vpop.f32.mrb[0].mxu0
        %v866 = vpop.f32.mrb[0].mxu0
        %v867 = vadd.f32 %v526, %v866
        %v868 = vpop.f32.mrb[0].mxu0
        %869 = vdwg.mxu0
        %870 = vst [vmem:[%s334] sm:$0xff] %v821
        %871 = vst [vmem:[%s334 + $0x8] sm:$0xff] %v823
        %872 = vst [vmem:[%s334 + $0x10] sm:$0xff] %v864
        %873 = vst [vmem:[%s334 + $0x18] sm:$0xff] %v825
        %874 = vst [vmem:[%s334 + $0x20] sm:$0xff] %v827
        %875 = vst [vmem:[%s334 + $0x28] sm:$0xff] %v867
        %s876 = smul.u32 %s34, 16
        %v877 = vlaneseq
        %v878 = vshrl.u32 %v877, 7
        %v879 = vadd.s32 %v878, 8
        %v880 = vstv %s876
        %v881 = vadd.s32 %v880, %v878
        %v882 = vadd.s32 %v880, %v879
        %vm883 = vcmp.lt.s32.totalorder %v881, 16
        %vm884 = vcmp.lt.s32.totalorder %v882, 16
        %v885 = vsel %vm883, 1, 0
        %v886 = vsel %vm884, 1, 0
        %v887 = vcvt.s32.f32 %v885
        %v888 = vcvt.s32.f32 %v886
        %v889 = vlaneseq
        %v890 = vand.u32 %v889, 127
        %vm891 = vcmp.lt.s32.totalorder %v890, 8
        %v892 = vsel %vm891, 1, 0
        %v893 = vcvt.s32.f32 %v892
        %v894 = vmul.f32 %v821, %v821
        %v895 = vmul.f32 %v825, %v825
        %896 = vadd.xlane.f32.xlu0 %v894
        %v897 = vpop.xlane.xlu0 %896
        %898 = vadd.xlane.f32.xlu0 %v895
        %v899 = vpop.xlane.xlu0 %898
        %v900 = vmul.f32 %v897, 0.5
        %v901 = vmul.f32 %v899, 0.5
        %v902 = vpack.c.bf16 %v825, %v821
        %v903 = vld [vmem:[#allocation8] sm:$0xf]
        %v904 = vld [vmem:[#allocation8 + $0x4] sm:$0xf]
        %v905 = vld [vmem:[#allocation8 + $0x8] sm:$0xf]
        %v906 = vld [vmem:[#allocation8 + $0xc] sm:$0xf]
        %v907 = vld [vmem:[#allocation8 + $0x10] sm:$0xf]
        %v908 = vld [vmem:[#allocation8 + $0x14] sm:$0xf]
        %v909 = vld [vmem:[#allocation8 + $0x18] sm:$0xf]
        %v910 = vld [vmem:[#allocation8 + $0x1c] sm:$0xf]
        %v911 = vld [vmem:[#allocation8 + $0x20] sm:$0xf]
        %v912 = vld [vmem:[#allocation8 + $0x24] sm:$0xf]
        %v913 = vld [vmem:[#allocation8 + $0x28] sm:$0xf]
        %v914 = vld [vmem:[#allocation8 + $0x2c] sm:$0xf]
        %v915 = vld [vmem:[#allocation8 + $0x30] sm:$0xf]
        %v916 = vld [vmem:[#allocation8 + $0x34] sm:$0xf]
        %v917 = vld [vmem:[#allocation8 + $0x38] sm:$0xf]
        %v918 = vld [vmem:[#allocation8 + $0x3c] sm:$0xf]
        %v935 = vunpack.c.l.b16 %v903
        %v936 = vunpack.c.l.b16 %v904
        %v937 = vunpack.c.l.b16 %v905
        %v938 = vunpack.c.l.b16 %v906
        %v939 = vunpack.c.l.b16 %v907
        %v940 = vunpack.c.l.b16 %v908
        %v941 = vunpack.c.l.b16 %v909
        %v942 = vunpack.c.l.b16 %v910
        %v943 = vunpack.c.l.b16 %v911
        %v944 = vunpack.c.l.b16 %v912
        %v945 = vunpack.c.l.b16 %v913
        %v946 = vunpack.c.l.b16 %v914
        %v947 = vunpack.c.l.b16 %v915
        %v948 = vunpack.c.l.b16 %v916
        %v949 = vunpack.c.l.b16 %v917
        %v950 = vunpack.c.l.b16 %v918
        %v951 = vpack.c.b16 %v936, %v935
        %v952 = vpack.c.b16 %v938, %v937
        %v953 = vpack.c.b16 %v940, %v939
        %v954 = vpack.c.b16 %v942, %v941
        %v955 = vpack.c.b16 %v944, %v943
        %v956 = vpack.c.b16 %v946, %v945
        %v957 = vpack.c.b16 %v948, %v947
        %v958 = vpack.c.b16 %v950, %v949
        %967 = vmatprep.subr.bf16.mxu0 0
        %968 = vmatpush1.bf16.msra.mxu0 %v951
        %969 = vmatprep.subr.bf16.mxu0 0
        %970 = vmatpush1.bf16.msra.mxu0 %v952
        %971 = vmatprep.subr.bf16.mxu0 0
        %972 = vmatpush1.bf16.msra.mxu0 %v953
        %973 = vmatprep.subr.bf16.mxu0 0
        %974 = vmatpush1.bf16.msra.mxu0 %v954
        %975 = vmatprep.subr.bf16.mxu0 0
        %976 = vmatpush1.bf16.msra.mxu0 %v955
        %977 = vmatprep.subr.bf16.mxu0 0
        %978 = vmatpush1.bf16.msra.mxu0 %v956
        %979 = vmatprep.subr.bf16.mxu0 0
        %980 = vmatpush1.bf16.msra.mxu0 %v957
        %981 = vmatprep.subr.bf16.mxu0 0
        %982 = vmatpush1.bf16.msra.mxu0 %v958
        %983 = vmatprep.subr.bf16.mxu0 0
        %984 = vmatpush1.bf16.msra.mxu0 0
        %985 = vmatprep.subr.bf16.mxu0 0
        %986 = vmatpush1.bf16.msra.mxu0 0
        %987 = vmatprep.subr.bf16.mxu0 0
        %988 = vmatpush1.bf16.msra.mxu0 0
        %989 = vmatprep.subr.bf16.mxu0 0
        %990 = vmatpush1.bf16.msra.mxu0 0
        %991 = vmatprep.subr.bf16.mxu0 0
        %992 = vmatpush1.bf16.msra.mxu0 0
        %993 = vmatprep.subr.bf16.mxu0 0
        %994 = vmatpush1.bf16.msra.mxu0 0
        %995 = vmatprep.subr.bf16.mxu0 0
        %996 = vmatpush1.bf16.msra.mxu0 0
        %997 = vmatprep.subr.bf16.mxu0 0
        %998 = vmatpush1.bf16.msra.mxu0 0
        %999 = vmatprep.mubr.bf16.mxu0 0
        %1000 = vmatmul.mubr.bf16.gmra.mrb[0].mxu0 %v902
        %v1001 = vpop.f32.mrb[0].mxu0
        %v1002 = vadd.f32 0.0, %v1001
        %v1003 = vpop.f32.mrb[0].mxu0
        %v1004 = vpop.f32.mrb[0].mxu0
        %v1005 = vadd.f32 0.0, %v1004
        %v1006 = vpop.f32.mrb[0].mxu0
        %1007 = vdwg.mxu0
        %v1008 = vsub.f32 %v1002, %v900
        %v1009 = vsub.f32 %v1005, %v901
        %v1010 = vmul.f32 %v1008, 1.442695
        %v1011 = vpow.pop %v1010
        %v1012 = vmul.f32 %v1009, 1.442695
        %v1013 = vpow.pop %v1012
        %v1014 = vmul.f32 %v893, 0.35355338
        %v1015 = vmul.f32 %v1011, %v1014
        %v1016 = vmul.f32 %v1013, %v1014
        %v1017 = vmul.f32 %v1015, %v887
        %v1018 = vmul.f32 %v1016, %v888
        %v1019 = vld [vmem:[%s341] sm:$0xff]
        %v1020 = vadd.f32 %v1017, %v1018
        %v1021 = vrot.slane %v1020, 4
        %v1022 = vadd.f32 %v1020, %v1021
        %v1023 = vrot.slane %v1022, 2
        %v1024 = vadd.f32 %v1022, %v1023
        %v1025 = vrot.slane %v1024, 1
        %v1026 = vadd.f32 %v1024, %v1025
        %v1027 = vadd.f32 %v1019, %v1026
        %1028 = vst [vmem:[%s341] sm:$0xff] %v1027
        %v1029 = vld [vmem:[%s348] sm:$0xff]
        %v1030 = vld [vmem:[%s348 + $0x8] sm:$0xff]
        %v1031 = vld [vmem:[%s348 + $0x10] sm:$0xff]
        %v1032 = vld [vmem:[%s348 + $0x18] sm:$0xff]
        %v1033 = vld [vmem:[%s348 + $0x20] sm:$0xff]
        %v1034 = vld [vmem:[%s348 + $0x28] sm:$0xff]
        %v1035 = vld [vmem:[%s348 + $0x30] sm:$0xff]
        %v1036 = vld [vmem:[%s348 + $0x38] sm:$0xff]
        %v1037 = vld [vmem:[%s348 + $0x40] sm:$0xff]
        %v1038 = vld [vmem:[%s348 + $0x48] sm:$0xff]
        %v1039 = vld [vmem:[%s348 + $0x50] sm:$0xff]
        %v1040 = vld [vmem:[%s348 + $0x58] sm:$0xff]
        %v1041 = vld [vmem:[%s348 + $0x60] sm:$0xff]
        %v1042 = vld [vmem:[%s348 + $0x68] sm:$0xff]
        %v1043 = vld [vmem:[%s348 + $0x70] sm:$0xff]
        %v1044 = vld [vmem:[%s348 + $0x78] sm:$0xff]
        %v1045 = vpack.c.bf16 %v1018, %v1017
        %v1046 = vpack.c.bf16 %v867, %v864
        %1047 = vxpose.xlu0.c.b16.start [1/8] %v1045, 128
        %1048 = vxpose.xlu0.c.b16.cont [2/8] 0, 128
        %1049 = vxpose.xlu0.c.b16.cont [3/8] 0, 128
        %1050 = vxpose.xlu0.c.b16.cont [4/8] 0, 128
        %1051 = vxpose.xlu0.c.b16.cont [5/8] 0, 128
        %1052 = vxpose.xlu0.c.b16.cont [6/8] 0, 128
        %1053 = vxpose.xlu0.c.b16.cont [7/8] 0, 128
        %1054 = vxpose.xlu0.c.b16.end [8/8] 0, 128
        %v1055 = vpop.trf.xlu0
        %v1056 = vpop.trf.xlu0
        %v1057 = vpop.trf.xlu0
        %v1058 = vpop.trf.xlu0
        %v1059 = vpop.trf.xlu0
        %v1060 = vpop.trf.xlu0
        %v1061 = vpop.trf.xlu0
        %v1062 = vpop.trf.xlu0
        %vm1063 = vcmask 130048
        %v1065 = vsel %vm1063, %v1055, 0
        %v1068 = vsel %vm1063, %v1056, 0
        %v1071 = vsel %vm1063, %v1057, 0
        %v1074 = vsel %vm1063, %v1058, 0
        %v1077 = vsel %vm1063, %v1059, 0
        %v1080 = vsel %vm1063, %v1060, 0
        %v1083 = vsel %vm1063, %v1061, 0
        %v1086 = vsel %vm1063, %v1062, 0
        %1088 = vmatprep.subr.bf16.mxu0 0
        %1089 = vmatpush1.bf16.msra.mxu0 %v1046
        %1090 = vmatprep.subr.bf16.mxu0 0
        %1091 = vmatpush1.bf16.msra.mxu0 0
        %1092 = vmatprep.subr.bf16.mxu0 0
        %1093 = vmatpush1.bf16.msra.mxu0 0
        %1094 = vmatprep.subr.bf16.mxu0 0
        %1095 = vmatpush1.bf16.msra.mxu0 0
        %1096 = vmatprep.subr.bf16.mxu0 0
        %1097 = vmatpush1.bf16.msra.mxu0 0
        %1098 = vmatprep.subr.bf16.mxu0 0
        %1099 = vmatpush1.bf16.msra.mxu0 0
        %1100 = vmatprep.subr.bf16.mxu0 0
        %1101 = vmatpush1.bf16.msra.mxu0 0
        %1102 = vmatprep.subr.bf16.mxu0 0
        %1103 = vmatpush1.bf16.msra.mxu0 0
        %1104 = vmatprep.subr.bf16.mxu0 0
        %1105 = vmatpush1.bf16.msra.mxu0 0
        %1106 = vmatprep.subr.bf16.mxu0 0
        %1107 = vmatpush1.bf16.msra.mxu0 0
        %1108 = vmatprep.subr.bf16.mxu0 0
        %1109 = vmatpush1.bf16.msra.mxu0 0
        %1110 = vmatprep.subr.bf16.mxu0 0
        %1111 = vmatpush1.bf16.msra.mxu0 0
        %1112 = vmatprep.subr.bf16.mxu0 0
        %1113 = vmatpush1.bf16.msra.mxu0 0
        %1114 = vmatprep.subr.bf16.mxu0 0
        %1115 = vmatpush1.bf16.msra.mxu0 0
        %1116 = vmatprep.subr.bf16.mxu0 0
        %1117 = vmatpush1.bf16.msra.mxu0 0
        %1118 = vmatprep.subr.bf16.mxu0 0
        %1119 = vmatpush1.bf16.msra.mxu0 0
        %1120 = vmatprep.mubr.bf16.mxu0 0
        %1121 = vmatmul.mubr.bf16.gmra.mrb[0].mxu0 %v1065
        %v1122 = vpop.f32.mrb[0].mxu0
        %v1123 = vadd.f32 0.0, %v1122
        %v1124 = vpop.f32.mrb[0].mxu0
        %v1125 = vpop.f32.mrb[0].mxu0
        %v1126 = vadd.f32 0.0, %v1125
        %v1127 = vpop.f32.mrb[0].mxu0
        %1128 = vmatprep.mubr.bf16.mxu0 0
        %1129 = vmatmul.mubr.bf16.gmra.mrb[0].mxu0 %v1068
        %v1130 = vpop.f32.mrb[0].mxu0
        %v1131 = vadd.f32 0.0, %v1130
        %v1132 = vpop.f32.mrb[0].mxu0
        %v1133 = vpop.f32.mrb[0].mxu0
        %v1134 = vadd.f32 0.0, %v1133
        %v1135 = vpop.f32.mrb[0].mxu0
        %1136 = vmatprep.mubr.bf16.mxu0 0
        %1137 = vmatmul.mubr.bf16.gmra.mrb[0].mxu0 %v1071
        %v1138 = vpop.f32.mrb[0].mxu0
        %v1139 = vadd.f32 0.0, %v1138
        %v1140 = vpop.f32.mrb[0].mxu0
        %v1141 = vpop.f32.mrb[0].mxu0
        %v1142 = vadd.f32 0.0, %v1141
        %v1143 = vpop.f32.mrb[0].mxu0
        %1144 = vmatprep.mubr.bf16.mxu0 0
        %1145 = vmatmul.mubr.bf16.gmra.mrb[0].mxu0 %v1074
        %v1146 = vpop.f32.mrb[0].mxu0
        %v1147 = vadd.f32 0.0, %v1146
        %v1148 = vpop.f32.mrb[0].mxu0
        %v1149 = vpop.f32.mrb[0].mxu0
        %v1150 = vadd.f32 0.0, %v1149
        %v1151 = vpop.f32.mrb[0].mxu0
        %1152 = vmatprep.mubr.bf16.mxu0 0
        %1153 = vmatmul.mubr.bf16.gmra.mrb[0].mxu0 %v1077
        %v1154 = vpop.f32.mrb[0].mxu0
        %v1155 = vadd.f32 0.0, %v1154
        %v1156 = vpop.f32.mrb[0].mxu0
        %v1157 = vpop.f32.mrb[0].mxu0
        %v1158 = vadd.f32 0.0, %v1157
        %v1159 = vpop.f32.mrb[0].mxu0
        %1160 = vmatprep.mubr.bf16.mxu0 0
        %1161 = vmatmul.mubr.bf16.gmra.mrb[0].mxu0 %v1080
        %v1162 = vpop.f32.mrb[0].mxu0
        %v1163 = vadd.f32 0.0, %v1162
        %v1164 = vpop.f32.mrb[0].mxu0
        %v1165 = vpop.f32.mrb[0].mxu0
        %v1166 = vadd.f32 0.0, %v1165
        %v1167 = vpop.f32.mrb[0].mxu0
        %1168 = vmatprep.mubr.bf16.mxu0 0
        %1169 = vmatmul.mubr.bf16.gmra.mrb[0].mxu0 %v1083
        %v1170 = vpop.f32.mrb[0].mxu0
        %v1171 = vadd.f32 0.0, %v1170
        %v1172 = vpop.f32.mrb[0].mxu0
        %v1173 = vpop.f32.mrb[0].mxu0
        %v1174 = vadd.f32 0.0, %v1173
        %v1175 = vpop.f32.mrb[0].mxu0
        %1176 = vmatprep.mubr.bf16.mxu0 0
        %1177 = vmatmul.mubr.bf16.gmra.mrb[0].mxu0 %v1086
        %v1178 = vpop.f32.mrb[0].mxu0
        %v1179 = vadd.f32 0.0, %v1178
        %v1180 = vpop.f32.mrb[0].mxu0
        %v1181 = vpop.f32.mrb[0].mxu0
        %v1182 = vadd.f32 0.0, %v1181
        %v1183 = vpop.f32.mrb[0].mxu0
        %1184 = vdwg.mxu0
        %v1185 = vadd.f32 %v1029, %v1123
        %v1186 = vadd.f32 %v1030, %v1126
        %v1187 = vadd.f32 %v1031, %v1131
        %v1188 = vadd.f32 %v1032, %v1134
        %v1189 = vadd.f32 %v1033, %v1139
        %v1190 = vadd.f32 %v1034, %v1142
        %v1191 = vadd.f32 %v1035, %v1147
        %v1192 = vadd.f32 %v1036, %v1150
        %v1193 = vadd.f32 %v1037, %v1155
        %v1194 = vadd.f32 %v1038, %v1158
        %v1195 = vadd.f32 %v1039, %v1163
        %v1196 = vadd.f32 %v1040, %v1166
        %v1197 = vadd.f32 %v1041, %v1171
        %v1198 = vadd.f32 %v1042, %v1174
        %v1199 = vadd.f32 %v1043, %v1179
        %v1200 = vadd.f32 %v1044, %v1182
        %1201 = vst [vmem:[%s348] sm:$0xff] %v1185
        %1202 = vst [vmem:[%s348 + $0x8] sm:$0xff] %v1186
        %1203 = vst [vmem:[%s348 + $0x10] sm:$0xff] %v1187
        %1204 = vst [vmem:[%s348 + $0x18] sm:$0xff] %v1188
        %1205 = vst [vmem:[%s348 + $0x20] sm:$0xff] %v1189
        %1206 = vst [vmem:[%s348 + $0x28] sm:$0xff] %v1190
        %1207 = vst [vmem:[%s348 + $0x30] sm:$0xff] %v1191
        %1208 = vst [vmem:[%s348 + $0x38] sm:$0xff] %v1192
        %1209 = vst [vmem:[%s348 + $0x40] sm:$0xff] %v1193
        %1210 = vst [vmem:[%s348 + $0x48] sm:$0xff] %v1194
        %1211 = vst [vmem:[%s348 + $0x50] sm:$0xff] %v1195
        %1212 = vst [vmem:[%s348 + $0x58] sm:$0xff] %v1196
        %1213 = vst [vmem:[%s348 + $0x60] sm:$0xff] %v1197
        %1214 = vst [vmem:[%s348 + $0x68] sm:$0xff] %v1198
        %1215 = vst [vmem:[%s348 + $0x70] sm:$0xff] %v1199
        %1216 = vst [vmem:[%s348 + $0x78] sm:$0xff] %v1200
        %s1217 = sand.u32 %s142, 1
        %s1218 = scalar_lea.sflag [#allocation4], %s1217
        %s1219 = sand.u32 %s142, 1
        %s1220 = smul.addr %s1219, 48
        %s1221 = scalar_lea.vmem [#allocation10], %s1220
        %s1222 = sand.u32 %s29, 1
        %s1223 = scalar_lea.sflag [#allocation12], %s1222
        %s1224 = sand.u32 %s168, 1
        %s1225 = smul.addr %s1224, 8
        %s1226 = scalar_lea.vmem [#allocation11], %s1225
        %s1227 = sand.u32 %s29, 1
        %s1228 = scalar_lea.sflag [#allocation12], %s1227
        %s1229 = sand.u32 %s194, 1
        %s1230 = smul.addr %s1229, 128
        %s1231 = scalar_lea.vmem [#allocation13], %s1230
        // Predicated region
        $region57: #{tpu_custom_call.1} parent=35 // pred_check
          %p1232 = pneg %p152
        $region58: #{tpu_custom_call.1} parent=35 // pred_check_branch
          %1234 = sbr.rel (%p1232) target = $region60
        $region59: #{tpu_custom_call.1} parent=35 // pred_region
          %s1235 = smul.u32 2, %s34
          %s1237 = ssub.s32 768, 768
          %1238 = vsyncadd %s1218, %s1237
          %s1239 = smul.addr %s1235, 3
          %s1240 = smul.addr %s33, 6
          %s1241 = sadd.s32 %s1239, %s1240
          %s1242 = smul.addr %s1241, 128
          %s1243 = scalar_lea.hbm %s4, %s1242
          %s1244 = sshll.u32 %s1221, 4
          %s1245 = int_to_ptr.vmem [resolvable:$true] %s1244
          %1250 = dma.vmem_to_hbm [thread:$0]  %s1245, 768, %s1243, %s1218, 384, 384, 24
        $region60: #{tpu_custom_call.1} parent=35 // pred_fallthru
          _
        // Predicated region
        $region61: #{tpu_custom_call.1} parent=35 // pred_check
          %p1251 = pneg %p178
        $region62: #{tpu_custom_call.1} parent=35 // pred_check_branch
          %1253 = sbr.rel (%p1251) target = $region64
        $region63: #{tpu_custom_call.1} parent=35 // pred_region
          %s1255 = ssub.s32 128, 128
          %1256 = vsyncadd %s1223, %s1255
          %s1257 = smul.addr %s33, 128
          %s1258 = scalar_lea.hbm %s5, %s1257
          %s1260 = sshll.u32 %s1226, 4
          %s1261 = int_to_ptr.vmem [resolvable:$true] %s1260
          %1263 = dma.vmem_to_hbm [thread:$0]  %s1261, 128, %s1258, %s1223
        $region64: #{tpu_custom_call.1} parent=35 // pred_fallthru
          _
        // Predicated region
        $region65: #{tpu_custom_call.1} parent=35 // pred_check
          %p1264 = pneg %p204
        $region66: #{tpu_custom_call.1} parent=35 // pred_check_branch
          %1266 = sbr.rel (%p1264) target = $region68
        $region67: #{tpu_custom_call.1} parent=35 // pred_region
          %s1268 = ssub.s32 2048, 2048
          %1269 = vsyncadd %s1228, %s1268
          %s1270 = smul.addr %s33, 16
          %s1271 = smul.addr %s1270, 128
          %s1272 = scalar_lea.hbm %s6, %s1271
          %s1273 = sshll.u32 %s1231, 4
          %s1274 = int_to_ptr.vmem [resolvable:$true] %s1273
          %1279 = dma.vmem_to_hbm [thread:$0]  %s1274, 2048, %s1272, %s1228, 128, 128, 8
        $region68: #{tpu_custom_call.1} parent=35 // pred_fallthru
          _
      $region36: #{tpu_custom_call.1} parent=5 // pred_fallthru
        _
      %p1280 = scmp.le.s32.totalorder 2, %s24
      // Predicated region
      $region69: #{tpu_custom_call.1} parent=5 // pred_check
        %p1281 = pneg %p1280
      $region70: #{tpu_custom_call.1} parent=5 // pred_check_branch
        %1283 = sbr.rel (%p1281) target = $region72
      $region71: #{tpu_custom_call.1} parent=5 // pred_region
        %s1284 = ssub.s32 %s24, 2
        // Predicated region
        $region73: #{tpu_custom_call.1} parent=71 // pred_check
          %p1285 = pneg %p158
        $region74: #{tpu_custom_call.1} parent=71 // pred_check_branch
          %1287 = sbr.rel (%p1285) target = $region76
        $region75: #{tpu_custom_call.1} parent=71 // pred_region
          %s1288 = sand.u32 %s143, 1
          %s1289 = scalar_lea.sflag [#allocation4], %s1288
          %s1290 = sand.u32 %s143, 1
          %s1291 = smul.addr %s1290, 48
          %s1292 = scalar_lea.vmem [#allocation10], %s1291
          %1293 = dma.done %s1289, 768
        $region76: #{tpu_custom_call.1} parent=71 // pred_fallthru
          _
        // Predicated region
        $region77: #{tpu_custom_call.1} parent=71 // pred_check
          %p1294 = pneg %p184
        $region78: #{tpu_custom_call.1} parent=71 // pred_check_branch
          %1296 = sbr.rel (%p1294) target = $region80
        $region79: #{tpu_custom_call.1} parent=71 // pred_region
          %s1297 = sand.u32 %s30, 1
          %s1298 = scalar_lea.sflag [#allocation12], %s1297
          %s1299 = sand.u32 %s169, 1
          %s1300 = smul.addr %s1299, 8
          %s1301 = scalar_lea.vmem [#allocation11], %s1300
          %1302 = dma.done %s1298, 128
        $region80: #{tpu_custom_call.1} parent=71 // pred_fallthru
          _
        // Predicated region
        $region81: #{tpu_custom_call.1} parent=71 // pred_check
          %p1303 = pneg %p210
        $region82: #{tpu_custom_call.1} parent=71 // pred_check_branch
          %1305 = sbr.rel (%p1303) target = $region84
        $region83: #{tpu_custom_call.1} parent=71 // pred_region
          %s1306 = sand.u32 %s30, 1
          %s1307 = scalar_lea.sflag [#allocation12], %s1306
          %s1308 = sand.u32 %s195, 1
          %s1309 = smul.addr %s1308, 128
          %s1310 = scalar_lea.vmem [#allocation13], %s1309
          %1311 = dma.done %s1307, 2048
        $region84: #{tpu_custom_call.1} parent=71 // pred_fallthru
          _
      $region72: #{tpu_custom_call.1} parent=5 // pred_fallthru
        _
    $region6: #{tpu_custom_call.1} parent=1 // loop_footer
      %s28 = sadd.s32 1, %s24
    $region7: #{tpu_custom_call.1} parent=1 // loop_footer_branch
      %23 = sbr.rel target = $region3
    $region8: #{tpu_custom_call.1} parent=1 // loop_exit
      _
    %1312 = vsyncpa [#allocation3], 1
    %s1313 = scalar_lea.sflag [#allocation3], 1
    %1314 = vsyncpa %s1313, 1
    %1315 = vsyncpa [#allocation6], 1
    %1316 = vsyncpa [#allocation9], 1
    %1317 = vsyncpa [#allocation4], 1
    %s1318 = scalar_lea.sflag [#allocation4], 1
    %1319 = vsyncpa %s1318, 1
    %1320 = vsyncpa [#allocation12], 1
    %s1321 = scalar_lea.sflag [#allocation12], 1
    %1322 = vsyncpa %s1321, 1

</llo_original>
